<compile_context>
chip_gen: v5e
topology: v5e:2x2
jax: 0.10.0
libtpu: 0.0.40
codegen_flags: <defaults>
</compile_context>

<pallas_src>
import functools

import jax
import jax.numpy as jnp
from jax import lax
from jax.experimental import pallas as pl
from jax.experimental.pallas import tpu as pltpu


def _conv3x3_prelu_kernel(body_ref, halo_ref, w_ref, b_ref, alpha_ref, o_ref):
    # body_ref:  (th, W+2, C)   bf16  rows [i*th, i*th+th) of the W-padded input
    # halo_ref:  (2, W+2, C)    bf16  padded row above / below this tile
    # w_ref:     (9*C, C_out)   bf16  im2col weights, tap-major rows
    # b_ref:     (1, C_out)     f32   bias
    # alpha_ref: (1,)           f32   PReLU parameter (SMEM scalar)
    # o_ref:     (th*W, C_out)  bf16  conv(+bias+PReLU) output tile (NHWC order)
    th, wp, c = body_ref.shape
    width = wp - 2
    c_out = w_ref.shape[1]

    halo = halo_ref[...]
    # Full (th+2)-row window for this tile: [row above; body; row below].
    window = jnp.concatenate([halo[0:1], body_ref[...], halo[1:2]], axis=0)

    # im2col: concat the nine shifted windows along channels -> (th*W, 9*C),
    # then a single deep-K MXU matmul (no per-tap accumulator RMW).
    taps = [window[kh:kh + th, kw:kw + width, :]
            for kh in range(3) for kw in range(3)]
    patch = jnp.concatenate(taps, axis=-1).reshape(th * width, 9 * c)

    acc = jnp.dot(patch, w_ref[...], preferred_element_type=jnp.float32)
    acc = acc + b_ref[...]                       # (1, C_out) broadcasts over rows
    alpha = alpha_ref[0]                         # scalar from SMEM
    acc = jnp.where(acc > 0.0, acc, alpha * acc)
    o_ref[...] = acc.astype(o_ref.dtype)


def _vmem_capacity_bytes():
    try:
        return int(pltpu.get_tpu_info().vmem_capacity_bytes)
    except Exception:
        return 64 << 20          # conservative fallback (v7x-sized VMEM)


def _plan_tiles(N, H, W, C, C_out, in_item, out_item, row_tile):
    """Pick the row tile (th) and an honest scoped-VMEM limit."""
    cap = _vmem_capacity_bytes()
    lane = lambda n: -(-n // 128) * 128
    sub = lambda n: -(-n // 8) * 8

    def vmem_need(th):
        rows = th * W
        body = 2 * th * sub(W + 2) * lane(C) * in_item        # double-buffered body blk
        halo = 2 * 2 * sub(W + 2) * lane(C) * in_item         # double-buffered halo blk
        window = (th + 2) * sub(W + 2) * lane(C) * in_item    # in-kernel concat temp
        patch = 2 * rows * lane(9 * C) * in_item              # im2col operand (+copy)
        wts = sub(9 * C) * lane(C_out) * in_item              # resident weights
        accf = rows * lane(C_out) * 4                         # f32 matmul result
        outb = 2 * rows * lane(C_out) * out_item              # double-buffered out blk
        return body + halo + window + patch + wts + accf + outb

    if row_tile is None:
        # Bigger tiles on 128 MiB parts (v5e/v6e), smaller on 64 MiB (v7x).
        target_rows = 6144 if cap >= (96 << 20) else 3072
        th = max(1, min(H, target_rows // max(W, 1)))
    else:
        th = max(1, min(H, int(row_tile)))
    if N == 1 and th >= H and H > 1:
        th = -(-H // 2)            # guarantee >= 2 parallel steps (v7x megacore)
    headroom = 20 << 20
    while th > 1 and vmem_need(th) > cap - headroom:
        th = max(1, th // 2)
    vmem_limit = int(min(cap - (16 << 20),
                         max(2 * vmem_need(th) + (8 << 20), 32 << 20)))
    return th, vmem_limit


def upsample_block(x, conv_w, conv_b, prelu_alpha, up_scale, *,
                   row_tile=None, compute_dtype=jnp.bfloat16,
                   store_dtype=jnp.bfloat16):
    """Forward pass of UpsampleBLock (Conv2d 3x3 same -> PixelShuffle -> PReLU).

    x:           (N, C, H, W) float32
    conv_w:      (C_out, C, 3, 3) with C_out = C * up_scale**2
    conv_b:      (C_out,)
    prelu_alpha: scalar (nn.PReLU() with a single shared parameter)
    returns      (N, C, H*up_scale, W*up_scale) float32
    """
    N, C, H, W = x.shape
    r = int(up_scale)
    C_out = C * r * r
    assert conv_w.shape == (C_out, C, 3, 3)

    in_item = jnp.dtype(compute_dtype).itemsize
    out_item = jnp.dtype(store_dtype).itemsize
    th, vmem_limit = _plan_tiles(N, H, W, C, C_out, in_item, out_item, row_tile)
    n_th = -(-H // th)                     # cdiv
    H_pad = n_th * th

    # Body rows: NHWC, streamed dtype, zero-padded in W (SAME) and bottom-padded
    # so every row tile is full.  One relayout pass over the (small) input.
    body = jnp.pad(jnp.transpose(x, (0, 2, 3, 1)).astype(compute_dtype),
                   ((0, 0), (0, H_pad - H), (1, 1), (0, 0)))         # (N,H_pad,W+2,C)

    # Halo rows: for tile i, the padded row above (i*th - 1) and below (i*th + th).
    # Built from tiny strided slices of x (2 rows per tile), not a full input copy.
    zrow = jnp.zeros((N, C, 1, W), x.dtype)
    top = jnp.concatenate([zrow, x[:, :, th - 1:(n_th - 1) * th:th, :]], axis=2)
    bot = jnp.concatenate([x[:, :, th:(n_th - 1) * th + 1:th, :], zrow], axis=2)
    halo = jnp.stack([top, bot], axis=3)                             # (N,C,n_th,2,W)
    halo = jnp.transpose(halo, (0, 2, 3, 4, 1)).astype(compute_dtype)
    halo = jnp.pad(halo, ((0, 0), (0, 0), (0, 0), (1, 1), (0, 0)))   # (N,n_th,2,W+2,C)

    # im2col weights, tap-major: w9[(kh*3+kw)*C + ci, co] = conv_w[co, ci, kh, kw].
    w9 = jnp.transpose(conv_w, (2, 3, 1, 0)).reshape(9 * C, C_out).astype(compute_dtype)
    b_mat = conv_b.astype(jnp.float32).reshape(1, C_out)
    alpha_arr = jnp.asarray(prelu_alpha, jnp.float32).reshape(1)

    flops = 2 * N * H_pad * W * 9 * C * C_out
    bytes_accessed = (body.size * in_item + halo.size * in_item +
                      w9.size * in_item + N * H_pad * W * C_out * out_item)

    out_flat = pl.pallas_call(
        _conv3x3_prelu_kernel,
        out_shape=jax.ShapeDtypeStruct((N, n_th, th * W, C_out), store_dtype),
        grid_spec=pltpu.PrefetchScalarGridSpec(
            num_scalar_prefetch=0,
            grid=(N, n_th),
            in_specs=[
                pl.BlockSpec((None, th, W + 2, C),
                             lambda n, i: (n, i, 0, 0)),
                pl.BlockSpec((None, None, 2, W + 2, C),
                             lambda n, i: (n, i, 0, 0, 0)),
                pl.BlockSpec((9 * C, C_out), lambda n, i: (0, 0)),
                pl.BlockSpec((1, C_out), lambda n, i: (0, 0)),
                pl.BlockSpec(memory_space=pltpu.MemorySpace.SMEM),
            ],
            out_specs=pl.BlockSpec((None, None, th * W, C_out),
                                   lambda n, i: (n, i, 0, 0)),
        ),
        compiler_params=pltpu.CompilerParams(
            dimension_semantics=("parallel", "parallel"),
            vmem_limit_bytes=vmem_limit),
        cost_estimate=pl.CostEstimate(flops=flops, transcendentals=0,
                                      bytes_accessed=bytes_accessed),
    )(body, halo, w9, b_mat, alpha_arr)

    # (N, n_th, th*W, C_out) reshapes straight to NHWC conv output.
    y = out_flat.reshape(N, H_pad, W, C_out)[:, :H]
    # PixelShuffle + NCHW.  Channels are already (C, r, r)-ordered, so this is a
    # single reshape + one transpose of the big tensor (read bf16, write f32).
    y = y.reshape(N, H, W, C, r, r)
    y = jnp.transpose(y, (0, 3, 1, 4, 2, 5)).astype(jnp.float32)     # (N,C,H,r,W,r)
    return y.reshape(N, C, H * r, W * r)


def _reference(x, conv_w, conv_b, prelu_alpha, up_scale):
    y = lax.conv_general_dilated(
        x, conv_w, window_strides=(1, 1), padding="SAME",
        dimension_numbers=("NCHW", "OIHW", "NCHW"),
        precision=lax.Precision.HIGHEST)
    y = y + conv_b[None, :, None, None]
    N, Co, H, W = y.shape
    r = up_scale
    C = Co // (r * r)
    y = y.reshape(N, C, r, r, H, W).transpose(0, 1, 4, 2, 5, 3)
    y = y.reshape(N, C, H * r, W * r)
    return jnp.where(y > 0, y, prelu_alpha * y)


if __name__ == "__main__":
    key = jax.random.PRNGKey(0)
    N, C, H, W = 2, 4, 16, 16
    up_scale = 2
    C_out = C * up_scale ** 2

    k1, k2, k3 = jax.random.split(key, 3)
    x = jax.random.normal(k1, (N, C, H, W), dtype=jnp.float32)
    fan_in = C * 9
    bound = 1.0 / (fan_in ** 0.5)
    conv_w = jax.random.uniform(k2, (C_out, C, 3, 3), jnp.float32, -bound, bound)
    conv_b = jax.random.uniform(k3, (C_out,), jnp.float32, -bound, bound)
    prelu_alpha = jnp.float32(0.25)     # nn.PReLU() default init

    fn = jax.jit(functools.partial(upsample_block, up_scale=up_scale))
    out = fn(x, conv_w, conv_b, prelu_alpha)
    out = jax.block_until_ready(out)
    assert out.shape == (N, C, H * up_scale, W * up_scale), out.shape

    # Check 1: against full-f32 module semantics, at bf16-streaming tolerance.
    ref_f32 = _reference(x, conv_w, conv_b, prelu_alpha, up_scale)
    assert jnp.allclose(out, ref_f32, rtol=5e-2, atol=5e-2), \
        "mismatch vs f32 reference"

    # Check 2 (tight): same bf16-rounded operands, f32 math -> isolates the
    # kernel's indexing correctness (remaining delta is the bf16 output store).
    xb = x.astype(jnp.bfloat16).astype(jnp.float32)
    wb = conv_w.astype(jnp.bfloat16).astype(jnp.float32)
    ref_bf16 = _reference(xb, wb, conv_b, prelu_alpha, up_scale)
    assert jnp.allclose(out, ref_bf16, rtol=1e-2, atol=1e-2), \
        "mismatch vs bf16-rounded reference"

    print("KERNEL_OK")
</pallas_src>

<mosaic_0001>
module attributes {stable_mosaic.version = 11 : i64} {
  func.func @_conv3x3_prelu_kernel(%arg0: i32, %arg1: i32, %arg2: memref<1x16x18x4xbf16, #tpu.memory_space<vmem>>, %arg3: memref<1x1x2x18x4xbf16, #tpu.memory_space<vmem>>, %arg4: memref<36x16xbf16, #tpu.memory_space<vmem>>, %arg5: memref<1x16xf32, #tpu.memory_space<vmem>>, %arg6: memref<1xf32, #tpu.memory_space<smem>>, %arg7: memref<1x1x256x16xbf16, #tpu.memory_space<vmem>>) attributes {dimension_semantics = [#tpu.dimension_semantics<parallel>, #tpu.dimension_semantics<parallel>], iteration_bounds = array<i64: 2, 1>, scalar_prefetch = 0 : i64, scratch_operands = 0 : i64, tpu.core_type = #tpu.core_type<tc>, window_params = [{transform_indices = @transform_0, window_bounds = array<i64: 1, 16, 18, 4>}, {transform_indices = @transform_1, window_bounds = array<i64: 1, 1, 2, 18, 4>}, {pipeline_mode = #tpu.pipeline_mode<synchronous>, transform_indices = @transform_2, window_bounds = array<i64: 36, 16>}, {pipeline_mode = #tpu.pipeline_mode<synchronous>, transform_indices = @transform_3, window_bounds = array<i64: 1, 16>}, {transform_indices = @transform_4, window_bounds = array<i64: 1>}, {transform_indices = @transform_5, window_bounds = array<i64: 1, 1, 256, 16>}]} {
    %c0 = arith.constant 0 : index
    %c0_0 = arith.constant 0 : index
    %c0_1 = arith.constant 0 : index
    %c0_2 = arith.constant 0 : index
    %c0_3 = arith.constant 0 : index
    %0 = vector.load %arg3[%c0, %c0_0, %c0_1, %c0_2, %c0_3] : memref<1x1x2x18x4xbf16, #tpu.memory_space<vmem>>, vector<1x1x2x18x4xbf16>
    %1 = vector.shape_cast %0 : vector<1x1x2x18x4xbf16> to vector<2x18x4xbf16>
    %2 = vector.extract_strided_slice %1 {offsets = [0, 0, 0], sizes = [1, 18, 4], strides = [1, 1, 1]} : vector<2x18x4xbf16> to vector<1x18x4xbf16>
    %c0_4 = arith.constant 0 : index
    %c0_5 = arith.constant 0 : index
    %c0_6 = arith.constant 0 : index
    %c0_7 = arith.constant 0 : index
    %3 = vector.load %arg2[%c0_4, %c0_5, %c0_6, %c0_7] : memref<1x16x18x4xbf16, #tpu.memory_space<vmem>>, vector<1x16x18x4xbf16>
    %4 = vector.shape_cast %3 : vector<1x16x18x4xbf16> to vector<16x18x4xbf16>
    %5 = vector.extract_strided_slice %1 {offsets = [1, 0, 0], sizes = [1, 18, 4], strides = [1, 1, 1]} : vector<2x18x4xbf16> to vector<1x18x4xbf16>
    %6 = tpu.concatenate %2, %4, %5 in 0 : vector<1x18x4xbf16>, vector<16x18x4xbf16>, vector<1x18x4xbf16> -> vector<18x18x4xbf16>
    %7 = vector.extract_strided_slice %6 {offsets = [0, 0, 0], sizes = [16, 16, 4], strides = [1, 1, 1]} : vector<18x18x4xbf16> to vector<16x16x4xbf16>
    %8 = vector.extract_strided_slice %6 {offsets = [0, 1, 0], sizes = [16, 16, 4], strides = [1, 1, 1]} : vector<18x18x4xbf16> to vector<16x16x4xbf16>
    %9 = vector.extract_strided_slice %6 {offsets = [0, 2, 0], sizes = [16, 16, 4], strides = [1, 1, 1]} : vector<18x18x4xbf16> to vector<16x16x4xbf16>
    %10 = vector.extract_strided_slice %6 {offsets = [1, 0, 0], sizes = [16, 16, 4], strides = [1, 1, 1]} : vector<18x18x4xbf16> to vector<16x16x4xbf16>
    %11 = vector.extract_strided_slice %6 {offsets = [1, 1, 0], sizes = [16, 16, 4], strides = [1, 1, 1]} : vector<18x18x4xbf16> to vector<16x16x4xbf16>
    %12 = vector.extract_strided_slice %6 {offsets = [1, 2, 0], sizes = [16, 16, 4], strides = [1, 1, 1]} : vector<18x18x4xbf16> to vector<16x16x4xbf16>
    %13 = vector.extract_strided_slice %6 {offsets = [2, 0, 0], sizes = [16, 16, 4], strides = [1, 1, 1]} : vector<18x18x4xbf16> to vector<16x16x4xbf16>
    %14 = vector.extract_strided_slice %6 {offsets = [2, 1, 0], sizes = [16, 16, 4], strides = [1, 1, 1]} : vector<18x18x4xbf16> to vector<16x16x4xbf16>
    %15 = vector.extract_strided_slice %6 {offsets = [2, 2, 0], sizes = [16, 16, 4], strides = [1, 1, 1]} : vector<18x18x4xbf16> to vector<16x16x4xbf16>
    %16 = tpu.concatenate %7, %8, %9, %10, %11, %12, %13, %14, %15 in 2 : vector<16x16x4xbf16>, vector<16x16x4xbf16>, vector<16x16x4xbf16>, vector<16x16x4xbf16>, vector<16x16x4xbf16>, vector<16x16x4xbf16>, vector<16x16x4xbf16>, vector<16x16x4xbf16>, vector<16x16x4xbf16> -> vector<16x16x36xbf16>
    %17 = vector.shape_cast %16 : vector<16x16x36xbf16> to vector<256x36xbf16>
    %c0_8 = arith.constant 0 : index
    %c0_9 = arith.constant 0 : index
    %18 = vector.load %arg4[%c0_8, %c0_9] : memref<36x16xbf16, #tpu.memory_space<vmem>>, vector<36x16xbf16>
    %cst = arith.constant dense<0.000000e+00> : vector<256x16xf32>
    %19 = tpu.matmul %17, %18, %cst {dimension_numbers = #tpu.dot_dimension_numbers<[1], [0], [0], [1], [0, 0, 1, 1], [], []>} : vector<256x36xbf16>, vector<36x16xbf16>, vector<256x16xf32> -> vector<256x16xf32>
    %c0_10 = arith.constant 0 : index
    %c0_11 = arith.constant 0 : index
    %20 = vector.load %arg5[%c0_10, %c0_11] : memref<1x16xf32, #tpu.memory_space<vmem>>, vector<1x16xf32>
    %21 = vector.broadcast %20 : vector<1x16xf32> to vector<256x16xf32>
    %22 = arith.addf %19, %21 : vector<256x16xf32>
    %c0_12 = arith.constant 0 : index
    %23 = memref.load %arg6[%c0_12] : memref<1xf32, #tpu.memory_space<smem>>
    %cst_13 = arith.constant 0.000000e+00 : f32
    %24 = vector.broadcast %cst_13 : f32 to vector<256x16xf32>
    %25 = arith.cmpf ogt, %22, %24 : vector<256x16xf32>
    %26 = vector.broadcast %23 : f32 to vector<256x16xf32>
    %27 = arith.mulf %26, %22 : vector<256x16xf32>
    %28 = arith.select %25, %22, %27 : vector<256x16xi1>, vector<256x16xf32>
    %29 = arith.truncf %28 : vector<256x16xf32> to vector<256x16xbf16>
    %c0_14 = arith.constant 0 : index
    %c0_15 = arith.constant 0 : index
    %c0_16 = arith.constant 0 : index
    %c0_17 = arith.constant 0 : index
    %30 = vector.load %arg7[%c0_14, %c0_15, %c0_16, %c0_17] : memref<1x1x256x16xbf16, #tpu.memory_space<vmem>>, vector<1x1x256x16xbf16>
    %31 = vector.shape_cast %30 : vector<1x1x256x16xbf16> to vector<256x16xbf16>
    %32 = vector.shape_cast %29 : vector<256x16xbf16> to vector<1x1x256x16xbf16>
    tpu.vector_store %arg7[%c0_14, %c0_15, %c0_16, %c0_17], %32 {strides = array<i32>} : memref<1x1x256x16xbf16, #tpu.memory_space<vmem>>, vector<1x1x256x16xbf16>,
    return
  }
  func.func @transform_0(%arg0: i32, %arg1: i32) -> (i32, i32, i32, i32) {
    %c0_i32 = arith.constant 0 : i32
    %c0_i32_0 = arith.constant 0 : i32
    %c0_i32_1 = arith.constant 0 : i32
    return %arg0, %arg1, %c0_i32, %c0_i32_0 : i32, i32, i32, i32
  }
  func.func @transform_1(%arg0: i32, %arg1: i32) -> (i32, i32, i32, i32, i32) {
    %c0_i32 = arith.constant 0 : i32
    %c0_i32_0 = arith.constant 0 : i32
    %c0_i32_1 = arith.constant 0 : i32
    %c0_i32_2 = arith.constant 0 : i32
    return %arg0, %arg1, %c0_i32, %c0_i32_0, %c0_i32_1 : i32, i32, i32, i32, i32
  }
  func.func @transform_2(%arg0: i32, %arg1: i32) -> (i32, i32) {
    %c0_i32 = arith.constant 0 : i32
    %c0_i32_0 = arith.constant 0 : i32
    %c0_i32_1 = arith.constant 0 : i32
    return %c0_i32, %c0_i32_0 : i32, i32
  }
  func.func @transform_3(%arg0: i32, %arg1: i32) -> (i32, i32) {
    %c0_i32 = arith.constant 0 : i32
    %c0_i32_0 = arith.constant 0 : i32
    %c0_i32_1 = arith.constant 0 : i32
    return %c0_i32, %c0_i32_0 : i32, i32
  }
  func.func @transform_4(%arg0: i32, %arg1: i32) -> i32 {
    %c0_i32 = arith.constant 0 : i32
    %c0_i32_0 = arith.constant 0 : i32
    return %c0_i32 : i32
  }
  func.func @transform_5(%arg0: i32, %arg1: i32) -> (i32, i32, i32, i32) {
    %c0_i32 = arith.constant 0 : i32
    %c0_i32_0 = arith.constant 0 : i32
    %c0_i32_1 = arith.constant 0 : i32
    return %arg0, %arg1, %c0_i32, %c0_i32_0 : i32, i32, i32, i32
  }
}

</mosaic_0001>

<llo_original>
// kernel: upsample_block.1
$region0: #{upsample_block.1}
  #allocation0 [shape = 'u32[]', space=smem, size = 0x4, offset = 0x4, fixed_abs, tag = 'smem constant byte address 0x4 - core index']
  #allocation1 [shape = 'u32[72,128]{1,0:T(1,128)}', space=vmem, size = 0x9000, scoped, tag = 'internal scratch']
  #allocation2 [shape = 'f32[1]{0:T(128)S(6)}', space=smem, size = 0x200, scoped, tag = 'scoped memory for upsample_block.1']
  %s0 = inlined_call_operand.vmem [shape: bf16[2,16,18,4], index: 0, kind: input, shape index: {}]
  %s1 = inlined_call_operand.vmem [shape: bf16[2,1,2,18,4], index: 1, kind: input, shape index: {}]
  %s2 = inlined_call_operand.vmem [shape: bf16[36,16], index: 2, kind: input, shape index: {}]
  %s3 = inlined_call_operand.vmem [shape: f32[1,16], index: 3, kind: input, shape index: {}]
  %s4 = inlined_call_operand.<no memory space> [shape: f32[1], index: 4, kind: input, shape index: {}]
  %s5 = inlined_call_operand.vmem [shape: bf16[2,1,256,16], index: 5, kind: output, shape index: {}]
  %s6 = sld [smem:[#allocation0]]
  $region53: #{upsample_block.1} parent=0
    _
  %s8 = ssub.s32 1, %s6
  %s9 = scalar_select 0, %s8, %s6
  %10 = sst [smem:[#allocation2]] %s4
  loop: start=0, step=1, limit=4
  $region2: #{upsample_block.1} parent=0 // loop_pre_header
    _
  $region3: #{upsample_block.1} parent=0 // loop_header
    %s12 = sphi 0, %s16
    %p13 = scmp.ge.s32.totalorder %s12, 4
    %s19 = sphi 0, %s31
    %s20 = sphi 0, %s27
    %s21 = sphi 0, %s19
    %s22 = sphi 0, %s20
    %s23 = sphi 0, %s21
    %s24 = sphi 0, %s22
    %s36 = sphi 0, %s38
    %s39 = sphi 0, %s36
    %s40 = sphi 0, %s39
    %s56 = sphi 0, %s40
    %s64 = sphi 0, %s66
    %s67 = sphi 0, %s64
    %s68 = sphi 0, %s67
    %s84 = sphi 0, %s68
    %s88 = sphi 0, %s88
    %s90 = sphi 0, %s88
    %s91 = sphi 0, %s90
    %s105 = sphi 0, %s91
    %s109 = sphi 0, %s109
    %s111 = sphi 0, %s109
    %s112 = sphi 0, %s111
    %s126 = sphi 0, %s112
    %s130 = sphi 0, %s130
    %s132 = sphi 0, %s130
    %s133 = sphi 0, %s132
    %s147 = sphi 0, %s133
    %s155 = sphi 0, %s157
    %s158 = sphi 0, %s155
    %s159 = sphi 0, %s158
    %s175 = sphi 0, %s159
  $region4: #{upsample_block.1} parent=0 // loop_header_branch
    %15 = sbr.rel (%p13) target = $region8
  $region5: #{upsample_block.1} parent=0 // loop_body
    %s17 = ssub.s32 %s12, 1
    %s18 = ssub.s32 %s12, 2
    %s25 = sadd.s32 1, %s20
    %p26 = scmp.ge.s32.totalorder %s25, 1
    %s27 = scalar_select %p26, 0, %s25
    %s28 = sadd.s32 1, %s19
    %s29 = scalar_select %p26, %s28, %s19
    %p30 = scmp.ge.s32.totalorder %s29, 2
    %s31 = scalar_select %p30, 0, %s29
    %s32 = ssub.s32 %s19, %s31
    %s33 = ssub.s32 %s20, %s27
    %s34 = sor.u32 %s32, %s33
    %p35 = scmp.eq.s32.totalorder %s34, 0
    %s37 = sadd.s32 %s36, 1
    %s38 = scalar_select %p35, %s36, %s37
    %p41 = pneg %p35
    %p42 = scmp.eq.s32.totalorder %s12, 1
    %p43 = por %p41, %p42
    %p44 = scmp.ne.s32.totalorder %s36, %s39
    %p45 = scmp.eq.s32.totalorder %s12, 0
    %p46 = por %p44, %p45
    %p47 = scmp.ne.s32.totalorder %s36, %s39
    %p48 = scmp.eq.s32.totalorder %s17, 1
    %p49 = por %p47, %p48
    %p50 = scmp.ne.s32.totalorder %s39, %s40
    %p51 = scmp.eq.s32.totalorder %s17, 0
    %p52 = por %p50, %p51
    %p53 = scmp.ne.s32.totalorder %s39, %s40
    %p54 = scmp.eq.s32.totalorder %s18, 1
    %p55 = por %p53, %p54
    %p57 = scmp.ne.s32.totalorder %s40, %s56
    %p58 = scmp.eq.s32.totalorder %s18, 0
    %p59 = por %p57, %p58
    %s60 = ssub.s32 %s19, %s31
    %s61 = ssub.s32 %s20, %s27
    %s62 = sor.u32 %s60, %s61
    %p63 = scmp.eq.s32.totalorder %s62, 0
    %s65 = sadd.s32 %s64, 1
    %s66 = scalar_select %p63, %s64, %s65
    %p69 = pneg %p63
    %p70 = scmp.eq.s32.totalorder %s12, 1
    %p71 = por %p69, %p70
    %p72 = scmp.ne.s32.totalorder %s64, %s67
    %p73 = scmp.eq.s32.totalorder %s12, 0
    %p74 = por %p72, %p73
    %p75 = scmp.ne.s32.totalorder %s64, %s67
    %p76 = scmp.eq.s32.totalorder %s17, 1
    %p77 = por %p75, %p76
    %p78 = scmp.ne.s32.totalorder %s67, %s68
    %p79 = scmp.eq.s32.totalorder %s17, 0
    %p80 = por %p78, %p79
    %p81 = scmp.ne.s32.totalorder %s67, %s68
    %p82 = scmp.eq.s32.totalorder %s18, 1
    %p83 = por %p81, %p82
    %p85 = scmp.ne.s32.totalorder %s68, %s84
    %p86 = scmp.eq.s32.totalorder %s18, 0
    %p87 = por %p85, %p86
    %s89 = sadd.s32 %s88, 1
    %p92 = scmp.eq.s32.totalorder %s12, 1
    %p93 = scmp.ne.s32.totalorder %s88, %s90
    %p94 = scmp.eq.s32.totalorder %s12, 0
    %p95 = por %p93, %p94
    %p96 = scmp.ne.s32.totalorder %s88, %s90
    %p97 = scmp.eq.s32.totalorder %s17, 1
    %p98 = por %p96, %p97
    %p99 = scmp.ne.s32.totalorder %s90, %s91
    %p100 = scmp.eq.s32.totalorder %s17, 0
    %p101 = por %p99, %p100
    %p102 = scmp.ne.s32.totalorder %s90, %s91
    %p103 = scmp.eq.s32.totalorder %s18, 1
    %p104 = por %p102, %p103
    %p106 = scmp.ne.s32.totalorder %s91, %s105
    %p107 = scmp.eq.s32.totalorder %s18, 0
    %p108 = por %p106, %p107
    %s110 = sadd.s32 %s109, 1
    %p113 = scmp.eq.s32.totalorder %s12, 1
    %p114 = scmp.ne.s32.totalorder %s109, %s111
    %p115 = scmp.eq.s32.totalorder %s12, 0
    %p116 = por %p114, %p115
    %p117 = scmp.ne.s32.totalorder %s109, %s111
    %p118 = scmp.eq.s32.totalorder %s17, 1
    %p119 = por %p117, %p118
    %p120 = scmp.ne.s32.totalorder %s111, %s112
    %p121 = scmp.eq.s32.totalorder %s17, 0
    %p122 = por %p120, %p121
    %p123 = scmp.ne.s32.totalorder %s111, %s112
    %p124 = scmp.eq.s32.totalorder %s18, 1
    %p125 = por %p123, %p124
    %p127 = scmp.ne.s32.totalorder %s112, %s126
    %p128 = scmp.eq.s32.totalorder %s18, 0
    %p129 = por %p127, %p128
    %s131 = sadd.s32 %s130, 1
    %p134 = scmp.eq.s32.totalorder %s12, 1
    %p135 = scmp.ne.s32.totalorder %s130, %s132
    %p136 = scmp.eq.s32.totalorder %s12, 0
    %p137 = por %p135, %p136
    %p138 = scmp.ne.s32.totalorder %s130, %s132
    %p139 = scmp.eq.s32.totalorder %s17, 1
    %p140 = por %p138, %p139
    %p141 = scmp.ne.s32.totalorder %s132, %s133
    %p142 = scmp.eq.s32.totalorder %s17, 0
    %p143 = por %p141, %p142
    %p144 = scmp.ne.s32.totalorder %s132, %s133
    %p145 = scmp.eq.s32.totalorder %s18, 1
    %p146 = por %p144, %p145
    %p148 = scmp.ne.s32.totalorder %s133, %s147
    %p149 = scmp.eq.s32.totalorder %s18, 0
    %p150 = por %p148, %p149
    %s151 = ssub.s32 %s19, %s31
    %s152 = ssub.s32 %s20, %s27
    %s153 = sor.u32 %s151, %s152
    %p154 = scmp.eq.s32.totalorder %s153, 0
    %s156 = sadd.s32 %s155, 1
    %s157 = scalar_select %p154, %s155, %s156
    %p160 = pneg %p154
    %p161 = scmp.eq.s32.totalorder %s12, 1
    %p162 = por %p160, %p161
    %p163 = scmp.ne.s32.totalorder %s155, %s158
    %p164 = scmp.eq.s32.totalorder %s12, 0
    %p165 = por %p163, %p164
    %p166 = scmp.ne.s32.totalorder %s155, %s158
    %p167 = scmp.eq.s32.totalorder %s17, 1
    %p168 = por %p166, %p167
    %p169 = scmp.ne.s32.totalorder %s158, %s159
    %p170 = scmp.eq.s32.totalorder %s17, 0
    %p171 = por %p169, %p170
    %p172 = scmp.ne.s32.totalorder %s158, %s159
    %p173 = scmp.eq.s32.totalorder %s18, 1
    %p174 = por %p172, %p173
    %p176 = scmp.ne.s32.totalorder %s159, %s175
    %p177 = scmp.eq.s32.totalorder %s18, 0
    %p178 = por %p176, %p177
    %p179 = scmp.le.s32.totalorder 1, %s12
    %p180 = scmp.lt.s32.totalorder %s12, 3
    %p181 = pnand %p179, %p180
    %p182 = pneg %p181
    // Predicated region
    $region9: #{upsample_block.1} parent=5 // pred_check
      _
    $region10: #{upsample_block.1} parent=5 // pred_check_branch
      %184 = sbr.rel (%p181) target = $region12
    $region11: #{upsample_block.1} parent=5 // pred_region
      %s185 = ssub.s32 %s12, 1
      // Predicated region
      $region13: #{upsample_block.1} parent=11 // pred_check
        %p186 = pneg %p101
      $region14: #{upsample_block.1} parent=11 // pred_check_branch
        %188 = sbr.rel (%p186) target = $region16
      $region15: #{upsample_block.1} parent=11 // pred_region
        _
      $region16: #{upsample_block.1} parent=11 // pred_fallthru
        _
      // Predicated region
      $region17: #{upsample_block.1} parent=11 // pred_check
        %p189 = pneg %p122
      $region18: #{upsample_block.1} parent=11 // pred_check_branch
        %191 = sbr.rel (%p189) target = $region20
      $region19: #{upsample_block.1} parent=11 // pred_region
        _
      $region20: #{upsample_block.1} parent=11 // pred_fallthru
        _
      // Predicated region
      $region21: #{upsample_block.1} parent=11 // pred_check
        %p192 = pneg %p143
      $region22: #{upsample_block.1} parent=11 // pred_check_branch
        %194 = sbr.rel (%p192) target = $region24
      $region23: #{upsample_block.1} parent=11 // pred_region
        _
      $region24: #{upsample_block.1} parent=11 // pred_fallthru
        _
    $region12: #{upsample_block.1} parent=5 // pred_fallthru
      _
    %p195 = scmp.lt.s32.totalorder %s12, 2
    // Predicated region
    $region25: #{upsample_block.1} parent=5 // pred_check
      %p196 = pneg %p195
    $region26: #{upsample_block.1} parent=5 // pred_check_branch
      %198 = sbr.rel (%p196) target = $region28
    $region27: #{upsample_block.1} parent=5 // pred_region
      // Predicated region
      $region29: #{upsample_block.1} parent=27 // pred_check
        %p199 = pneg %p46
      $region30: #{upsample_block.1} parent=27 // pred_check_branch
        %201 = sbr.rel (%p199) target = $region32
      $region31: #{upsample_block.1} parent=27 // pred_region
        %s202 = smul.u32 16, %s20
        %p203 = scmp.lt.s32.totalorder %s19, 1
        %s204 = scalar_select %p203, %s19, 1
        %p205 = scmp.lt.s32.totalorder %s202, 15
        %s206 = scalar_select %p205, %s202, 15
        %s207 = smul.addr %s206, 3
        %s208 = smul.addr %s204, 48
        %s209 = sadd.s32 %s207, %s208
        %s210 = smul.addr %s209, 4
        %s211 = scalar_lea.vmem %s0, %s210
        %s212 = smul.u32 16, %s20
      $region32: #{upsample_block.1} parent=27 // pred_fallthru
        _
      // Predicated region
      $region33: #{upsample_block.1} parent=27 // pred_check
        %p213 = pneg %p74
      $region34: #{upsample_block.1} parent=27 // pred_check_branch
        %215 = sbr.rel (%p213) target = $region36
      $region35: #{upsample_block.1} parent=27 // pred_region
        %p216 = scmp.lt.s32.totalorder %s19, 1
        %s217 = scalar_select %p216, %s19, 1
        %p218 = scmp.lt.s32.totalorder %s20, 0
        %s219 = scalar_select %p218, %s20, 0
        %s220 = smul.addr %s219, 6
        %s221 = smul.addr %s217, 6
        %s222 = sadd.s32 %s220, %s221
        %s223 = smul.addr %s222, 4
        %s224 = scalar_lea.vmem %s1, %s223
      $region36: #{upsample_block.1} parent=27 // pred_fallthru
        _
    $region28: #{upsample_block.1} parent=5 // pred_fallthru
      _
    %p225 = scmp.le.s32.totalorder 1, %s12
    %p226 = scmp.lt.s32.totalorder %s12, 3
    %p227 = pnand %p225, %p226
    %p228 = pneg %p227
    // Predicated region
    $region37: #{upsample_block.1} parent=5 // pred_check
      _
    $region38: #{upsample_block.1} parent=5 // pred_check_branch
      %230 = sbr.rel (%p227) target = $region40
    $region39: #{upsample_block.1} parent=5 // pred_region
      %s231 = ssub.s32 %s12, 1
      %s232 = smul.u32 16, %s22
      %p233 = scmp.lt.s32.totalorder %s21, 1
      %s234 = scalar_select %p233, %s21, 1
      %p235 = scmp.lt.s32.totalorder %s232, 15
      %s236 = scalar_select %p235, %s232, 15
      %s237 = smul.addr %s236, 3
      %s238 = smul.addr %s234, 48
      %s239 = sadd.s32 %s237, %s238
      %s240 = smul.addr %s239, 4
      %s241 = scalar_lea.vmem %s0, %s240
      %p242 = pneg %p52
      %p243 = pneg %p49
      %p244 = scmp.lt.s32.totalorder %s21, 1
      %s245 = scalar_select %p244, %s21, 1
      %p246 = scmp.lt.s32.totalorder %s22, 0
      %s247 = scalar_select %p246, %s22, 0
      %s248 = smul.addr %s247, 6
      %s249 = smul.addr %s245, 6
      %s250 = sadd.s32 %s248, %s249
      %s251 = smul.addr %s250, 4
      %s252 = scalar_lea.vmem %s1, %s251
      %p253 = pneg %p80
      %p254 = pneg %p77
      %p255 = pneg %p101
      %p256 = pneg %p98
      %p257 = pneg %p122
      %p258 = pneg %p119
      %p259 = pneg %p143
      %p260 = pneg %p140
      %p261 = pneg %p171
      %p262 = pneg %p168
      %p263 = scmp.lt.s32.totalorder %s21, 1
      %s264 = scalar_select %p263, %s21, 1
      %p265 = scmp.lt.s32.totalorder %s22, 0
      %s266 = scalar_select %p265, %s22, 0
      %s267 = smul.addr %s266, 32
      %s268 = smul.addr %s264, 32
      %s269 = sadd.s32 %s267, %s268
      %s270 = smul.addr %s269, 4
      %s271 = scalar_lea.vmem %s5, %s270
      %s272 = smul.u32 16, %s22
      %p273 = scmp.lt.s32.totalorder %s21, 1
      %s274 = scalar_select %p273, %s21, 1
      %p275 = scmp.lt.s32.totalorder %s272, 15
      %s276 = scalar_select %p275, %s272, 15
      %s277 = smul.addr %s276, 3
      %s278 = smul.addr %s274, 48
      %s279 = sadd.s32 %s277, %s278
      %s280 = smul.addr %s279, 4
      %s281 = scalar_lea.vmem %s0, %s280
      %s282 = smul.u32 16, %s22
      %p283 = scmp.lt.s32.totalorder %s21, 1
      %s284 = scalar_select %p283, %s21, 1
      %p285 = scmp.lt.s32.totalorder %s22, 0
      %s286 = scalar_select %p285, %s22, 0
      %s287 = smul.addr %s286, 6
      %s288 = smul.addr %s284, 6
      %s289 = sadd.s32 %s287, %s288
      %s290 = smul.addr %s289, 4
      %s291 = scalar_lea.vmem %s1, %s290
      %p292 = scmp.lt.s32.totalorder %s21, 1
      %s293 = scalar_select %p292, %s21, 1
      %p294 = scmp.lt.s32.totalorder %s22, 0
      %s295 = scalar_select %p294, %s22, 0
      %s296 = smul.addr %s295, 32
      %s297 = smul.addr %s293, 32
      %s298 = sadd.s32 %s296, %s297
      %s299 = smul.addr %s298, 4
      %s300 = scalar_lea.vmem %s5, %s299
      %v302 = vld [vmem:[%s291] sm:$0xf]
      %v303 = vld [vmem:[%s291 + $0x4] sm:$0xf]
      %v304 = vld [vmem:[%s291 + $0x8] sm:$0x1]
      %v305 = vld [vmem:[%s291 + $0xc] sm:$0xf]
      %v306 = vld [vmem:[%s291 + $0x10] sm:$0xf]
      %v307 = vld [vmem:[%s291 + $0x14] sm:$0x1]
      %v308 = vld [vmem:[%s281] sm:$0xf]
      %v309 = vld [vmem:[%s281 + $0x4] sm:$0xf]
      %v310 = vld [vmem:[%s281 + $0x8] sm:$0x1]
      %v311 = vld [vmem:[%s281 + $0xc] sm:$0xf]
      %v312 = vld [vmem:[%s281 + $0x10] sm:$0xf]
      %v313 = vld [vmem:[%s281 + $0x14] sm:$0x1]
      %v314 = vld [vmem:[%s281 + $0x18] sm:$0xf]
      %v315 = vld [vmem:[%s281 + $0x1c] sm:$0xf]
      %v316 = vld [vmem:[%s281 + $0x20] sm:$0x1]
      %v317 = vld [vmem:[%s281 + $0x24] sm:$0xf]
      %v318 = vld [vmem:[%s281 + $0x28] sm:$0xf]
      %v319 = vld [vmem:[%s281 + $0x2c] sm:$0x1]
      %v320 = vld [vmem:[%s281 + $0x30] sm:$0xf]
      %v321 = vld [vmem:[%s281 + $0x34] sm:$0xf]
      %v322 = vld [vmem:[%s281 + $0x38] sm:$0x1]
      %v323 = vld [vmem:[%s281 + $0x3c] sm:$0xf]
      %v324 = vld [vmem:[%s281 + $0x40] sm:$0xf]
      %v325 = vld [vmem:[%s281 + $0x44] sm:$0x1]
      %v326 = vld [vmem:[%s281 + $0x48] sm:$0xf]
      %v327 = vld [vmem:[%s281 + $0x4c] sm:$0xf]
      %v328 = vld [vmem:[%s281 + $0x50] sm:$0x1]
      %v329 = vld [vmem:[%s281 + $0x54] sm:$0xf]
      %v330 = vld [vmem:[%s281 + $0x58] sm:$0xf]
      %v331 = vld [vmem:[%s281 + $0x5c] sm:$0x1]
      %v332 = vld [vmem:[%s281 + $0x60] sm:$0xf]
      %v333 = vld [vmem:[%s281 + $0x64] sm:$0xf]
      %v334 = vld [vmem:[%s281 + $0x68] sm:$0x1]
      %v335 = vld [vmem:[%s281 + $0x6c] sm:$0xf]
      %v336 = vld [vmem:[%s281 + $0x70] sm:$0xf]
      %v337 = vld [vmem:[%s281 + $0x74] sm:$0x1]
      %v338 = vld [vmem:[%s281 + $0x78] sm:$0xf]
      %v339 = vld [vmem:[%s281 + $0x7c] sm:$0xf]
      %v340 = vld [vmem:[%s281 + $0x80] sm:$0x1]
      %v341 = vld [vmem:[%s281 + $0x84] sm:$0xf]
      %v342 = vld [vmem:[%s281 + $0x88] sm:$0xf]
      %v343 = vld [vmem:[%s281 + $0x8c] sm:$0x1]
      %v344 = vld [vmem:[%s281 + $0x90] sm:$0xf]
      %v345 = vld [vmem:[%s281 + $0x94] sm:$0xf]
      %v346 = vld [vmem:[%s281 + $0x98] sm:$0x1]
      %v347 = vld [vmem:[%s281 + $0x9c] sm:$0xf]
      %v348 = vld [vmem:[%s281 + $0xa0] sm:$0xf]
      %v349 = vld [vmem:[%s281 + $0xa4] sm:$0x1]
      %v350 = vld [vmem:[%s281 + $0xa8] sm:$0xf]
      %v351 = vld [vmem:[%s281 + $0xac] sm:$0xf]
      %v352 = vld [vmem:[%s281 + $0xb0] sm:$0x1]
      %v353 = vld [vmem:[%s281 + $0xb4] sm:$0xf]
      %v354 = vld [vmem:[%s281 + $0xb8] sm:$0xf]
      %v355 = vld [vmem:[%s281 + $0xbc] sm:$0x1]
      %v388 = vunpack.c.l.b16 %v302
      %v389 = vunpack.c.l.b16 %v303
      %v390 = vunpack.c.l.b16 %v308
      %v391 = vunpack.c.l.b16 %v309
      %v392 = vunpack.c.l.b16 %v311
      %v393 = vunpack.c.l.b16 %v312
      %v394 = vunpack.c.l.b16 %v314
      %v395 = vunpack.c.l.b16 %v315
      %v396 = vunpack.c.l.b16 %v317
      %v397 = vunpack.c.l.b16 %v318
      %v398 = vunpack.c.l.b16 %v320
      %v399 = vunpack.c.l.b16 %v321
      %v400 = vunpack.c.l.b16 %v323
      %v401 = vunpack.c.l.b16 %v324
      %v402 = vunpack.c.l.b16 %v326
      %v403 = vunpack.c.l.b16 %v327
      %v404 = vunpack.c.l.b16 %v329
      %v405 = vunpack.c.l.b16 %v330
      %v406 = vunpack.c.l.b16 %v332
      %v407 = vunpack.c.l.b16 %v333
      %v408 = vunpack.c.l.b16 %v335
      %v409 = vunpack.c.l.b16 %v336
      %v410 = vunpack.c.l.b16 %v338
      %v411 = vunpack.c.l.b16 %v339
      %v412 = vunpack.c.l.b16 %v341
      %v413 = vunpack.c.l.b16 %v342
      %v414 = vunpack.c.l.b16 %v344
      %v415 = vunpack.c.l.b16 %v345
      %v416 = vunpack.c.l.b16 %v347
      %v417 = vunpack.c.l.b16 %v348
      %v418 = vunpack.c.l.b16 %v350
      %v419 = vunpack.c.l.b16 %v351
      %v420 = vpack.c.b16 %v389, %v388
      %v421 = vpack.c.b16 %v391, %v390
      %v422 = vpack.c.b16 %v393, %v392
      %v423 = vpack.c.b16 %v395, %v394
      %v424 = vpack.c.b16 %v397, %v396
      %v425 = vpack.c.b16 %v399, %v398
      %v426 = vpack.c.b16 %v401, %v400
      %v427 = vpack.c.b16 %v403, %v402
      %v428 = vpack.c.b16 %v405, %v404
      %v429 = vpack.c.b16 %v407, %v406
      %v430 = vpack.c.b16 %v409, %v408
      %v431 = vpack.c.b16 %v411, %v410
      %v432 = vpack.c.b16 %v413, %v412
      %v433 = vpack.c.b16 %v415, %v414
      %v434 = vpack.c.b16 %v417, %v416
      %v435 = vpack.c.b16 %v419, %v418
      %v452 = vunpack.c.l.b16 %v304
      %v453 = vunpack.c.l.b16 %v310
      %v454 = vunpack.c.l.b16 %v313
      %v455 = vunpack.c.l.b16 %v316
      %v456 = vunpack.c.l.b16 %v319
      %v457 = vunpack.c.l.b16 %v322
      %v458 = vunpack.c.l.b16 %v325
      %v459 = vunpack.c.l.b16 %v328
      %v460 = vunpack.c.l.b16 %v331
      %v461 = vunpack.c.l.b16 %v334
      %v462 = vunpack.c.l.b16 %v337
      %v463 = vunpack.c.l.b16 %v340
      %v464 = vunpack.c.l.b16 %v343
      %v465 = vunpack.c.l.b16 %v346
      %v466 = vunpack.c.l.b16 %v349
      %v467 = vunpack.c.l.b16 %v352
      %v468 = vpack.c.b16 %v452, %v452
      %v469 = vpack.c.b16 %v453, %v453
      %v470 = vpack.c.b16 %v454, %v454
      %v471 = vpack.c.b16 %v455, %v455
      %v472 = vpack.c.b16 %v456, %v456
      %v473 = vpack.c.b16 %v457, %v457
      %v474 = vpack.c.b16 %v458, %v458
      %v475 = vpack.c.b16 %v459, %v459
      %v476 = vpack.c.b16 %v460, %v460
      %v477 = vpack.c.b16 %v461, %v461
      %v478 = vpack.c.b16 %v462, %v462
      %v479 = vpack.c.b16 %v463, %v463
      %v480 = vpack.c.b16 %v464, %v464
      %v481 = vpack.c.b16 %v465, %v465
      %v482 = vpack.c.b16 %v466, %v466
      %v483 = vpack.c.b16 %v467, %v467
      %vm484 = vsmask.f32 7424
      %v486 = vshrl.u32 %v420, 16
      %v488 = vshll.u32 %v420, 16
      %v490 = vrot.slane %v488, 1
      %v491 = vor.u32 %v486, %v490
      %v493 = vshll.u32 %v468, 16
      %v495 = vrot.slane %v493, 1
      %v496 = vsel %vm484, %v491, %v495
      %v498 = vshrl.u32 %v421, 16
      %v500 = vshll.u32 %v421, 16
      %v502 = vrot.slane %v500, 1
      %v503 = vor.u32 %v498, %v502
      %v505 = vshll.u32 %v469, 16
      %v507 = vrot.slane %v505, 1
      %v508 = vsel %vm484, %v503, %v507
      %v510 = vshrl.u32 %v422, 16
      %v512 = vshll.u32 %v422, 16
      %v514 = vrot.slane %v512, 1
      %v515 = vor.u32 %v510, %v514
      %v517 = vshll.u32 %v470, 16
      %v519 = vrot.slane %v517, 1
      %v520 = vsel %vm484, %v515, %v519
      %v522 = vshrl.u32 %v423, 16
      %v524 = vshll.u32 %v423, 16
      %v526 = vrot.slane %v524, 1
      %v527 = vor.u32 %v522, %v526
      %v529 = vshll.u32 %v471, 16
      %v531 = vrot.slane %v529, 1
      %v532 = vsel %vm484, %v527, %v531
      %v534 = vshrl.u32 %v424, 16
      %v536 = vshll.u32 %v424, 16
      %v538 = vrot.slane %v536, 1
      %v539 = vor.u32 %v534, %v538
      %v541 = vshll.u32 %v472, 16
      %v543 = vrot.slane %v541, 1
      %v544 = vsel %vm484, %v539, %v543
      %v546 = vshrl.u32 %v425, 16
      %v548 = vshll.u32 %v425, 16
      %v550 = vrot.slane %v548, 1
      %v551 = vor.u32 %v546, %v550
      %v553 = vshll.u32 %v473, 16
      %v555 = vrot.slane %v553, 1
      %v556 = vsel %vm484, %v551, %v555
      %v558 = vshrl.u32 %v426, 16
      %v560 = vshll.u32 %v426, 16
      %v562 = vrot.slane %v560, 1
      %v563 = vor.u32 %v558, %v562
      %v565 = vshll.u32 %v474, 16
      %v567 = vrot.slane %v565, 1
      %v568 = vsel %vm484, %v563, %v567
      %v570 = vshrl.u32 %v427, 16
      %v572 = vshll.u32 %v427, 16
      %v574 = vrot.slane %v572, 1
      %v575 = vor.u32 %v570, %v574
      %v577 = vshll.u32 %v475, 16
      %v579 = vrot.slane %v577, 1
      %v580 = vsel %vm484, %v575, %v579
      %v582 = vshrl.u32 %v428, 16
      %v584 = vshll.u32 %v428, 16
      %v586 = vrot.slane %v584, 1
      %v587 = vor.u32 %v582, %v586
      %v589 = vshll.u32 %v476, 16
      %v591 = vrot.slane %v589, 1
      %v592 = vsel %vm484, %v587, %v591
      %v594 = vshrl.u32 %v429, 16
      %v596 = vshll.u32 %v429, 16
      %v598 = vrot.slane %v596, 1
      %v599 = vor.u32 %v594, %v598
      %v601 = vshll.u32 %v477, 16
      %v603 = vrot.slane %v601, 1
      %v604 = vsel %vm484, %v599, %v603
      %v606 = vshrl.u32 %v430, 16
      %v608 = vshll.u32 %v430, 16
      %v610 = vrot.slane %v608, 1
      %v611 = vor.u32 %v606, %v610
      %v613 = vshll.u32 %v478, 16
      %v615 = vrot.slane %v613, 1
      %v616 = vsel %vm484, %v611, %v615
      %v618 = vshrl.u32 %v431, 16
      %v620 = vshll.u32 %v431, 16
      %v622 = vrot.slane %v620, 1
      %v623 = vor.u32 %v618, %v622
      %v625 = vshll.u32 %v479, 16
      %v627 = vrot.slane %v625, 1
      %v628 = vsel %vm484, %v623, %v627
      %v630 = vshrl.u32 %v432, 16
      %v632 = vshll.u32 %v432, 16
      %v634 = vrot.slane %v632, 1
      %v635 = vor.u32 %v630, %v634
      %v637 = vshll.u32 %v480, 16
      %v639 = vrot.slane %v637, 1
      %v640 = vsel %vm484, %v635, %v639
      %v642 = vshrl.u32 %v433, 16
      %v644 = vshll.u32 %v433, 16
      %v646 = vrot.slane %v644, 1
      %v647 = vor.u32 %v642, %v646
      %v649 = vshll.u32 %v481, 16
      %v651 = vrot.slane %v649, 1
      %v652 = vsel %vm484, %v647, %v651
      %v654 = vshrl.u32 %v434, 16
      %v656 = vshll.u32 %v434, 16
      %v658 = vrot.slane %v656, 1
      %v659 = vor.u32 %v654, %v658
      %v661 = vshll.u32 %v482, 16
      %v663 = vrot.slane %v661, 1
      %v664 = vsel %vm484, %v659, %v663
      %v666 = vshrl.u32 %v435, 16
      %v668 = vshll.u32 %v435, 16
      %v670 = vrot.slane %v668, 1
      %v671 = vor.u32 %v666, %v670
      %v673 = vshll.u32 %v483, 16
      %v675 = vrot.slane %v673, 1
      %v676 = vsel %vm484, %v671, %v675
      %677 = vrot.lane.b32.xlu0 %v496, 4
      %v678 = vpop.permute.xlu0 %677
      %679 = vrot.lane.b32.xlu0 %v508, 4
      %v680 = vpop.permute.xlu0 %679
      %681 = vrot.lane.b32.xlu0 %v520, 4
      %v682 = vpop.permute.xlu0 %681
      %683 = vrot.lane.b32.xlu0 %v532, 4
      %v684 = vpop.permute.xlu0 %683
      %685 = vrot.lane.b32.xlu0 %v544, 4
      %v686 = vpop.permute.xlu0 %685
      %687 = vrot.lane.b32.xlu0 %v556, 4
      %v688 = vpop.permute.xlu0 %687
      %689 = vrot.lane.b32.xlu0 %v568, 4
      %v690 = vpop.permute.xlu0 %689
      %691 = vrot.lane.b32.xlu0 %v580, 4
      %v692 = vpop.permute.xlu0 %691
      %693 = vrot.lane.b32.xlu0 %v592, 4
      %v694 = vpop.permute.xlu0 %693
      %695 = vrot.lane.b32.xlu0 %v604, 4
      %v696 = vpop.permute.xlu0 %695
      %697 = vrot.lane.b32.xlu0 %v616, 4
      %v698 = vpop.permute.xlu0 %697
      %699 = vrot.lane.b32.xlu0 %v628, 4
      %v700 = vpop.permute.xlu0 %699
      %701 = vrot.lane.b32.xlu0 %v640, 4
      %v702 = vpop.permute.xlu0 %701
      %703 = vrot.lane.b32.xlu0 %v652, 4
      %v704 = vpop.permute.xlu0 %703
      %705 = vrot.lane.b32.xlu0 %v664, 4
      %v706 = vpop.permute.xlu0 %705
      %707 = vrot.lane.b32.xlu0 %v676, 4
      %v708 = vpop.permute.xlu0 %707
      %vm709 = vcmask 1046528
      %v710 = vrot.slane %v420, 1
      %v711 = vrot.slane %v468, 1
      %v712 = vsel %vm709, %v710, %v711
      %v713 = vrot.slane %v421, 1
      %v714 = vrot.slane %v469, 1
      %v715 = vsel %vm709, %v713, %v714
      %v716 = vrot.slane %v422, 1
      %v717 = vrot.slane %v470, 1
      %v718 = vsel %vm709, %v716, %v717
      %v719 = vrot.slane %v423, 1
      %v720 = vrot.slane %v471, 1
      %v721 = vsel %vm709, %v719, %v720
      %v722 = vrot.slane %v424, 1
      %v723 = vrot.slane %v472, 1
      %v724 = vsel %vm709, %v722, %v723
      %v725 = vrot.slane %v425, 1
      %v726 = vrot.slane %v473, 1
      %v727 = vsel %vm709, %v725, %v726
      %v728 = vrot.slane %v426, 1
      %v729 = vrot.slane %v474, 1
      %v730 = vsel %vm709, %v728, %v729
      %v731 = vrot.slane %v427, 1
      %v732 = vrot.slane %v475, 1
      %v733 = vsel %vm709, %v731, %v732
      %v734 = vrot.slane %v428, 1
      %v735 = vrot.slane %v476, 1
      %v736 = vsel %vm709, %v734, %v735
      %v737 = vrot.slane %v429, 1
      %v738 = vrot.slane %v477, 1
      %v739 = vsel %vm709, %v737, %v738
      %v740 = vrot.slane %v430, 1
      %v741 = vrot.slane %v478, 1
      %v742 = vsel %vm709, %v740, %v741
      %v743 = vrot.slane %v431, 1
      %v744 = vrot.slane %v479, 1
      %v745 = vsel %vm709, %v743, %v744
      %v746 = vrot.slane %v432, 1
      %v747 = vrot.slane %v480, 1
      %v748 = vsel %vm709, %v746, %v747
      %v749 = vrot.slane %v433, 1
      %v750 = vrot.slane %v481, 1
      %v751 = vsel %vm709, %v749, %v750
      %v752 = vrot.slane %v434, 1
      %v753 = vrot.slane %v482, 1
      %v754 = vsel %vm709, %v752, %v753
      %v755 = vrot.slane %v435, 1
      %v756 = vrot.slane %v483, 1
      %v757 = vsel %vm709, %v755, %v756
      %758 = vrot.lane.b32.xlu0 %v712, 8
      %v759 = vpop.permute.xlu0 %758
      %760 = vrot.lane.b32.xlu0 %v715, 8
      %v761 = vpop.permute.xlu0 %760
      %762 = vrot.lane.b32.xlu0 %v718, 8
      %v763 = vpop.permute.xlu0 %762
      %764 = vrot.lane.b32.xlu0 %v721, 8
      %v765 = vpop.permute.xlu0 %764
      %766 = vrot.lane.b32.xlu0 %v724, 8
      %v767 = vpop.permute.xlu0 %766
      %768 = vrot.lane.b32.xlu0 %v727, 8
      %v769 = vpop.permute.xlu0 %768
      %770 = vrot.lane.b32.xlu0 %v730, 8
      %v771 = vpop.permute.xlu0 %770
      %772 = vrot.lane.b32.xlu0 %v733, 8
      %v773 = vpop.permute.xlu0 %772
      %774 = vrot.lane.b32.xlu0 %v736, 8
      %v775 = vpop.permute.xlu0 %774
      %776 = vrot.lane.b32.xlu0 %v739, 8
      %v777 = vpop.permute.xlu0 %776
      %778 = vrot.lane.b32.xlu0 %v742, 8
      %v779 = vpop.permute.xlu0 %778
      %780 = vrot.lane.b32.xlu0 %v745, 8
      %v781 = vpop.permute.xlu0 %780
      %782 = vrot.lane.b32.xlu0 %v748, 8
      %v783 = vpop.permute.xlu0 %782
      %784 = vrot.lane.b32.xlu0 %v751, 8
      %v785 = vpop.permute.xlu0 %784
      %786 = vrot.lane.b32.xlu0 %v754, 8
      %v787 = vpop.permute.xlu0 %786
      %788 = vrot.lane.b32.xlu0 %v757, 8
      %v789 = vpop.permute.xlu0 %788
      %v792 = vunpack.c.l.b16 %v353
      %v793 = vunpack.c.l.b16 %v354
      %v794 = vpack.c.b16 %v793, %v792
      %795 = vrot.lane.b32.xlu0 %v421, 12
      %v796 = vpop.permute.xlu0 %795
      %797 = vrot.lane.b32.xlu0 %v422, 12
      %v798 = vpop.permute.xlu0 %797
      %799 = vrot.lane.b32.xlu0 %v423, 12
      %v800 = vpop.permute.xlu0 %799
      %801 = vrot.lane.b32.xlu0 %v424, 12
      %v802 = vpop.permute.xlu0 %801
      %803 = vrot.lane.b32.xlu0 %v425, 12
      %v804 = vpop.permute.xlu0 %803
      %805 = vrot.lane.b32.xlu0 %v426, 12
      %v806 = vpop.permute.xlu0 %805
      %807 = vrot.lane.b32.xlu0 %v427, 12
      %v808 = vpop.permute.xlu0 %807
      %809 = vrot.lane.b32.xlu0 %v428, 12
      %v810 = vpop.permute.xlu0 %809
      %811 = vrot.lane.b32.xlu0 %v429, 12
      %v812 = vpop.permute.xlu0 %811
      %813 = vrot.lane.b32.xlu0 %v430, 12
      %v814 = vpop.permute.xlu0 %813
      %815 = vrot.lane.b32.xlu0 %v431, 12
      %v816 = vpop.permute.xlu0 %815
      %817 = vrot.lane.b32.xlu0 %v432, 12
      %v818 = vpop.permute.xlu0 %817
      %819 = vrot.lane.b32.xlu0 %v433, 12
      %v820 = vpop.permute.xlu0 %819
      %821 = vrot.lane.b32.xlu0 %v434, 12
      %v822 = vpop.permute.xlu0 %821
      %823 = vrot.lane.b32.xlu0 %v435, 12
      %v824 = vpop.permute.xlu0 %823
      %825 = vrot.lane.b32.xlu0 %v794, 12
      %v826 = vpop.permute.xlu0 %825
      %v828 = vunpack.c.l.b16 %v355
      %v829 = vpack.c.b16 %v828, %v828
      %v831 = vshrl.u32 %v794, 16
      %v833 = vshll.u32 %v794, 16
      %v835 = vrot.slane %v833, 1
      %v836 = vor.u32 %v831, %v835
      %v838 = vshll.u32 %v829, 16
      %v840 = vrot.slane %v838, 1
      %v841 = vsel %vm484, %v836, %v840
      %842 = vrot.lane.b32.xlu0 %v508, 16
      %v843 = vpop.permute.xlu0 %842
      %844 = vrot.lane.b32.xlu0 %v520, 16
      %v845 = vpop.permute.xlu0 %844
      %846 = vrot.lane.b32.xlu0 %v532, 16
      %v847 = vpop.permute.xlu0 %846
      %848 = vrot.lane.b32.xlu0 %v544, 16
      %v849 = vpop.permute.xlu0 %848
      %850 = vrot.lane.b32.xlu0 %v556, 16
      %v851 = vpop.permute.xlu0 %850
      %852 = vrot.lane.b32.xlu0 %v568, 16
      %v853 = vpop.permute.xlu0 %852
      %854 = vrot.lane.b32.xlu0 %v580, 16
      %v855 = vpop.permute.xlu0 %854
      %856 = vrot.lane.b32.xlu0 %v592, 16
      %v857 = vpop.permute.xlu0 %856
      %858 = vrot.lane.b32.xlu0 %v604, 16
      %v859 = vpop.permute.xlu0 %858
      %860 = vrot.lane.b32.xlu0 %v616, 16
      %v861 = vpop.permute.xlu0 %860
      %862 = vrot.lane.b32.xlu0 %v628, 16
      %v863 = vpop.permute.xlu0 %862
      %864 = vrot.lane.b32.xlu0 %v640, 16
      %v865 = vpop.permute.xlu0 %864
      %866 = vrot.lane.b32.xlu0 %v652, 16
      %v867 = vpop.permute.xlu0 %866
      %868 = vrot.lane.b32.xlu0 %v664, 16
      %v869 = vpop.permute.xlu0 %868
      %870 = vrot.lane.b32.xlu0 %v676, 16
      %v871 = vpop.permute.xlu0 %870
      %872 = vrot.lane.b32.xlu0 %v841, 16
      %v873 = vpop.permute.xlu0 %872
      %v874 = vrot.slane %v794, 1
      %v875 = vrot.slane %v829, 1
      %v876 = vsel %vm709, %v874, %v875
      %877 = vrot.lane.b32.xlu0 %v715, 20
      %v878 = vpop.permute.xlu0 %877
      %879 = vrot.lane.b32.xlu0 %v718, 20
      %v880 = vpop.permute.xlu0 %879
      %881 = vrot.lane.b32.xlu0 %v721, 20
      %v882 = vpop.permute.xlu0 %881
      %883 = vrot.lane.b32.xlu0 %v724, 20
      %v884 = vpop.permute.xlu0 %883
      %885 = vrot.lane.b32.xlu0 %v727, 20
      %v886 = vpop.permute.xlu0 %885
      %887 = vrot.lane.b32.xlu0 %v730, 20
      %v888 = vpop.permute.xlu0 %887
      %889 = vrot.lane.b32.xlu0 %v733, 20
      %v890 = vpop.permute.xlu0 %889
      %891 = vrot.lane.b32.xlu0 %v736, 20
      %v892 = vpop.permute.xlu0 %891
      %893 = vrot.lane.b32.xlu0 %v739, 20
      %v894 = vpop.permute.xlu0 %893
      %895 = vrot.lane.b32.xlu0 %v742, 20
      %v896 = vpop.permute.xlu0 %895
      %897 = vrot.lane.b32.xlu0 %v745, 20
      %v898 = vpop.permute.xlu0 %897
      %899 = vrot.lane.b32.xlu0 %v748, 20
      %v900 = vpop.permute.xlu0 %899
      %901 = vrot.lane.b32.xlu0 %v751, 20
      %v902 = vpop.permute.xlu0 %901
      %903 = vrot.lane.b32.xlu0 %v754, 20
      %v904 = vpop.permute.xlu0 %903
      %905 = vrot.lane.b32.xlu0 %v757, 20
      %v906 = vpop.permute.xlu0 %905
      %907 = vrot.lane.b32.xlu0 %v876, 20
      %v908 = vpop.permute.xlu0 %907
      %v911 = vunpack.c.l.b16 %v305
      %v912 = vunpack.c.l.b16 %v306
      %v913 = vpack.c.b16 %v912, %v911
      %914 = vrot.lane.b32.xlu0 %v422, 24
      %v915 = vpop.permute.xlu0 %914
      %916 = vrot.lane.b32.xlu0 %v423, 24
      %v917 = vpop.permute.xlu0 %916
      %918 = vrot.lane.b32.xlu0 %v424, 24
      %v919 = vpop.permute.xlu0 %918
      %920 = vrot.lane.b32.xlu0 %v425, 24
      %v921 = vpop.permute.xlu0 %920
      %922 = vrot.lane.b32.xlu0 %v426, 24
      %v923 = vpop.permute.xlu0 %922
      %924 = vrot.lane.b32.xlu0 %v427, 24
      %v925 = vpop.permute.xlu0 %924
      %926 = vrot.lane.b32.xlu0 %v428, 24
      %v927 = vpop.permute.xlu0 %926
      %928 = vrot.lane.b32.xlu0 %v429, 24
      %v929 = vpop.permute.xlu0 %928
      %930 = vrot.lane.b32.xlu0 %v430, 24
      %v931 = vpop.permute.xlu0 %930
      %932 = vrot.lane.b32.xlu0 %v431, 24
      %v933 = vpop.permute.xlu0 %932
      %934 = vrot.lane.b32.xlu0 %v432, 24
      %v935 = vpop.permute.xlu0 %934
      %936 = vrot.lane.b32.xlu0 %v433, 24
      %v937 = vpop.permute.xlu0 %936
      %938 = vrot.lane.b32.xlu0 %v434, 24
      %v939 = vpop.permute.xlu0 %938
      %940 = vrot.lane.b32.xlu0 %v435, 24
      %v941 = vpop.permute.xlu0 %940
      %942 = vrot.lane.b32.xlu0 %v794, 24
      %v943 = vpop.permute.xlu0 %942
      %944 = vrot.lane.b32.xlu0 %v913, 24
      %v945 = vpop.permute.xlu0 %944
      %v947 = vunpack.c.l.b16 %v307
      %v948 = vpack.c.b16 %v947, %v947
      %v950 = vshrl.u32 %v913, 16
      %v952 = vshll.u32 %v913, 16
      %v954 = vrot.slane %v952, 1
      %v955 = vor.u32 %v950, %v954
      %v957 = vshll.u32 %v948, 16
      %v959 = vrot.slane %v957, 1
      %v960 = vsel %vm484, %v955, %v959
      %961 = vrot.lane.b32.xlu0 %v520, 28
      %v962 = vpop.permute.xlu0 %961
      %963 = vrot.lane.b32.xlu0 %v532, 28
      %v964 = vpop.permute.xlu0 %963
      %965 = vrot.lane.b32.xlu0 %v544, 28
      %v966 = vpop.permute.xlu0 %965
      %967 = vrot.lane.b32.xlu0 %v556, 28
      %v968 = vpop.permute.xlu0 %967
      %969 = vrot.lane.b32.xlu0 %v568, 28
      %v970 = vpop.permute.xlu0 %969
      %971 = vrot.lane.b32.xlu0 %v580, 28
      %v972 = vpop.permute.xlu0 %971
      %973 = vrot.lane.b32.xlu0 %v592, 28
      %v974 = vpop.permute.xlu0 %973
      %975 = vrot.lane.b32.xlu0 %v604, 28
      %v976 = vpop.permute.xlu0 %975
      %977 = vrot.lane.b32.xlu0 %v616, 28
      %v978 = vpop.permute.xlu0 %977
      %979 = vrot.lane.b32.xlu0 %v628, 28
      %v980 = vpop.permute.xlu0 %979
      %981 = vrot.lane.b32.xlu0 %v640, 28
      %v982 = vpop.permute.xlu0 %981
      %983 = vrot.lane.b32.xlu0 %v652, 28
      %v984 = vpop.permute.xlu0 %983
      %985 = vrot.lane.b32.xlu0 %v664, 28
      %v986 = vpop.permute.xlu0 %985
      %987 = vrot.lane.b32.xlu0 %v676, 28
      %v988 = vpop.permute.xlu0 %987
      %989 = vrot.lane.b32.xlu0 %v841, 28
      %v990 = vpop.permute.xlu0 %989
      %991 = vrot.lane.b32.xlu0 %v960, 28
      %v992 = vpop.permute.xlu0 %991
      %v993 = vrot.slane %v913, 1
      %v994 = vrot.slane %v948, 1
      %v995 = vsel %vm709, %v993, %v994
      %996 = vrot.lane.b32.xlu0 %v718, 32
      %v997 = vpop.permute.xlu0 %996
      %998 = vrot.lane.b32.xlu0 %v721, 32
      %v999 = vpop.permute.xlu0 %998
      %1000 = vrot.lane.b32.xlu0 %v724, 32
      %v1001 = vpop.permute.xlu0 %1000
      %1002 = vrot.lane.b32.xlu0 %v727, 32
      %v1003 = vpop.permute.xlu0 %1002
      %1004 = vrot.lane.b32.xlu0 %v730, 32
      %v1005 = vpop.permute.xlu0 %1004
      %1006 = vrot.lane.b32.xlu0 %v733, 32
      %v1007 = vpop.permute.xlu0 %1006
      %1008 = vrot.lane.b32.xlu0 %v736, 32
      %v1009 = vpop.permute.xlu0 %1008
      %1010 = vrot.lane.b32.xlu0 %v739, 32
      %v1011 = vpop.permute.xlu0 %1010
      %1012 = vrot.lane.b32.xlu0 %v742, 32
      %v1013 = vpop.permute.xlu0 %1012
      %1014 = vrot.lane.b32.xlu0 %v745, 32
      %v1015 = vpop.permute.xlu0 %1014
      %1016 = vrot.lane.b32.xlu0 %v748, 32
      %v1017 = vpop.permute.xlu0 %1016
      %1018 = vrot.lane.b32.xlu0 %v751, 32
      %v1019 = vpop.permute.xlu0 %1018
      %1020 = vrot.lane.b32.xlu0 %v754, 32
      %v1021 = vpop.permute.xlu0 %1020
      %1022 = vrot.lane.b32.xlu0 %v757, 32
      %v1023 = vpop.permute.xlu0 %1022
      %1024 = vrot.lane.b32.xlu0 %v876, 32
      %v1025 = vpop.permute.xlu0 %1024
      %1026 = vrot.lane.b32.xlu0 %v995, 32
      %v1027 = vpop.permute.xlu0 %1026
      %vm1028 = vcmask 31744
      %v1030 = vsel %vm1028, %v420, %v678
      %v1032 = vsel %vm1028, %v421, %v680
      %v1034 = vsel %vm1028, %v422, %v682
      %v1036 = vsel %vm1028, %v423, %v684
      %v1038 = vsel %vm1028, %v424, %v686
      %v1040 = vsel %vm1028, %v425, %v688
      %v1042 = vsel %vm1028, %v426, %v690
      %v1044 = vsel %vm1028, %v427, %v692
      %v1046 = vsel %vm1028, %v428, %v694
      %v1048 = vsel %vm1028, %v429, %v696
      %v1050 = vsel %vm1028, %v430, %v698
      %v1052 = vsel %vm1028, %v431, %v700
      %v1054 = vsel %vm1028, %v432, %v702
      %v1056 = vsel %vm1028, %v433, %v704
      %v1058 = vsel %vm1028, %v434, %v706
      %v1060 = vsel %vm1028, %v435, %v708
      %vm1061 = vcmask 64512
      %v1063 = vsel %vm1061, %v1030, %v759
      %v1065 = vsel %vm1061, %v1032, %v761
      %v1067 = vsel %vm1061, %v1034, %v763
      %v1069 = vsel %vm1061, %v1036, %v765
      %v1071 = vsel %vm1061, %v1038, %v767
      %v1073 = vsel %vm1061, %v1040, %v769
      %v1075 = vsel %vm1061, %v1042, %v771
      %v1077 = vsel %vm1061, %v1044, %v773
      %v1079 = vsel %vm1061, %v1046, %v775
      %v1081 = vsel %vm1061, %v1048, %v777
      %v1083 = vsel %vm1061, %v1050, %v779
      %v1085 = vsel %vm1061, %v1052, %v781
      %v1087 = vsel %vm1061, %v1054, %v783
      %v1089 = vsel %vm1061, %v1056, %v785
      %v1091 = vsel %vm1061, %v1058, %v787
      %v1093 = vsel %vm1061, %v1060, %v789
      %vm1094 = vcmask 97280
      %v1096 = vsel %vm1094, %v1063, %v796
      %v1098 = vsel %vm1094, %v1065, %v798
      %v1100 = vsel %vm1094, %v1067, %v800
      %v1102 = vsel %vm1094, %v1069, %v802
      %v1104 = vsel %vm1094, %v1071, %v804
      %v1106 = vsel %vm1094, %v1073, %v806
      %v1108 = vsel %vm1094, %v1075, %v808
      %v1110 = vsel %vm1094, %v1077, %v810
      %v1112 = vsel %vm1094, %v1079, %v812
      %v1114 = vsel %vm1094, %v1081, %v814
      %v1116 = vsel %vm1094, %v1083, %v816
      %v1118 = vsel %vm1094, %v1085, %v818
      %v1120 = vsel %vm1094, %v1087, %v820
      %v1122 = vsel %vm1094, %v1089, %v822
      %v1124 = vsel %vm1094, %v1091, %v824
      %v1126 = vsel %vm1094, %v1093, %v826
      %vm1127 = vcmask 130048
      %v1129 = vsel %vm1127, %v1096, %v843
      %v1131 = vsel %vm1127, %v1098, %v845
      %v1133 = vsel %vm1127, %v1100, %v847
      %v1135 = vsel %vm1127, %v1102, %v849
      %v1137 = vsel %vm1127, %v1104, %v851
      %v1139 = vsel %vm1127, %v1106, %v853
      %v1141 = vsel %vm1127, %v1108, %v855
      %v1143 = vsel %vm1127, %v1110, %v857
      %v1145 = vsel %vm1127, %v1112, %v859
      %v1147 = vsel %vm1127, %v1114, %v861
      %v1149 = vsel %vm1127, %v1116, %v863
      %v1151 = vsel %vm1127, %v1118, %v865
      %v1153 = vsel %vm1127, %v1120, %v867
      %v1155 = vsel %vm1127, %v1122, %v869
      %v1157 = vsel %vm1127, %v1124, %v871
      %v1159 = vsel %vm1127, %v1126, %v873
      %vm1160 = vcmask 162816
      %v1162 = vsel %vm1160, %v1129, %v878
      %v1164 = vsel %vm1160, %v1131, %v880
      %v1166 = vsel %vm1160, %v1133, %v882
      %v1168 = vsel %vm1160, %v1135, %v884
      %v1170 = vsel %vm1160, %v1137, %v886
      %v1172 = vsel %vm1160, %v1139, %v888
      %v1174 = vsel %vm1160, %v1141, %v890
      %v1176 = vsel %vm1160, %v1143, %v892
      %v1178 = vsel %vm1160, %v1145, %v894
      %v1180 = vsel %vm1160, %v1147, %v896
      %v1182 = vsel %vm1160, %v1149, %v898
      %v1184 = vsel %vm1160, %v1151, %v900
      %v1186 = vsel %vm1160, %v1153, %v902
      %v1188 = vsel %vm1160, %v1155, %v904
      %v1190 = vsel %vm1160, %v1157, %v906
      %v1192 = vsel %vm1160, %v1159, %v908
      %vm1193 = vcmask 195584
      %v1195 = vsel %vm1193, %v1162, %v915
      %v1197 = vsel %vm1193, %v1164, %v917
      %v1199 = vsel %vm1193, %v1166, %v919
      %v1201 = vsel %vm1193, %v1168, %v921
      %v1203 = vsel %vm1193, %v1170, %v923
      %v1205 = vsel %vm1193, %v1172, %v925
      %v1207 = vsel %vm1193, %v1174, %v927
      %v1209 = vsel %vm1193, %v1176, %v929
      %v1211 = vsel %vm1193, %v1178, %v931
      %v1213 = vsel %vm1193, %v1180, %v933
      %v1215 = vsel %vm1193, %v1182, %v935
      %v1217 = vsel %vm1193, %v1184, %v937
      %v1219 = vsel %vm1193, %v1186, %v939
      %v1221 = vsel %vm1193, %v1188, %v941
      %v1223 = vsel %vm1193, %v1190, %v943
      %v1225 = vsel %vm1193, %v1192, %v945
      %vm1226 = vcmask 228352
      %v1228 = vsel %vm1226, %v1195, %v962
      %v1230 = vsel %vm1226, %v1197, %v964
      %v1232 = vsel %vm1226, %v1199, %v966
      %v1234 = vsel %vm1226, %v1201, %v968
      %v1236 = vsel %vm1226, %v1203, %v970
      %v1238 = vsel %vm1226, %v1205, %v972
      %v1240 = vsel %vm1226, %v1207, %v974
      %v1242 = vsel %vm1226, %v1209, %v976
      %v1244 = vsel %vm1226, %v1211, %v978
      %v1246 = vsel %vm1226, %v1213, %v980
      %v1248 = vsel %vm1226, %v1215, %v982
      %v1250 = vsel %vm1226, %v1217, %v984
      %v1252 = vsel %vm1226, %v1219, %v986
      %v1254 = vsel %vm1226, %v1221, %v988
      %v1256 = vsel %vm1226, %v1223, %v990
      %v1258 = vsel %vm1226, %v1225, %v992
      %vm1259 = vcmask 261120
      %v1261 = vsel %vm1259, %v1228, %v997
      %v1263 = vsel %vm1259, %v1230, %v999
      %v1265 = vsel %vm1259, %v1232, %v1001
      %v1267 = vsel %vm1259, %v1234, %v1003
      %v1269 = vsel %vm1259, %v1236, %v1005
      %v1271 = vsel %vm1259, %v1238, %v1007
      %v1273 = vsel %vm1259, %v1240, %v1009
      %v1275 = vsel %vm1259, %v1242, %v1011
      %v1277 = vsel %vm1259, %v1244, %v1013
      %v1279 = vsel %vm1259, %v1246, %v1015
      %v1281 = vsel %vm1259, %v1248, %v1017
      %v1283 = vsel %vm1259, %v1250, %v1019
      %v1285 = vsel %vm1259, %v1252, %v1021
      %v1287 = vsel %vm1259, %v1254, %v1023
      %v1289 = vsel %vm1259, %v1256, %v1025
      %v1291 = vsel %vm1259, %v1258, %v1027
      %v1292 = vld [vmem:[%s2] sm:$0xf]
      %v1293 = vld [vmem:[%s2 + $0x4] sm:$0xf]
      %v1294 = vld [vmem:[%s2 + $0x8] sm:$0xf]
      %v1295 = vld [vmem:[%s2 + $0xc] sm:$0xf]
      %v1296 = vld [vmem:[%s2 + $0x10] sm:$0x3]
      %v1297 = vld [vmem:[%s3] sm:$0x1]
      %v1299 = vperm.slane %v1297, 0
      %v1306 = vunpack.c.l.b16 %v1292
      %v1307 = vunpack.c.l.b16 %v1293
      %v1308 = vunpack.c.l.b16 %v1294
      %v1309 = vunpack.c.l.b16 %v1295
      %v1310 = vunpack.c.l.b16 %v1296
      %v1311 = vpack.c.b16 %v1307, %v1306
      %v1312 = vpack.c.b16 %v1309, %v1308
      %v1313 = vpack.c.b16 %v1310, %v1310
      %vm1316 = vcmask 293888
      %v1317 = vsel %vm1316, %v1261, 0
      %v1319 = vsel %vm1316, %v1263, 0
      %v1321 = vsel %vm1316, %v1265, 0
      %v1323 = vsel %vm1316, %v1267, 0
      %v1325 = vsel %vm1316, %v1269, 0
      %v1327 = vsel %vm1316, %v1271, 0
      %v1329 = vsel %vm1316, %v1273, 0
      %v1331 = vsel %vm1316, %v1275, 0
      %v1333 = vsel %vm1316, %v1277, 0
      %v1335 = vsel %vm1316, %v1279, 0
      %v1337 = vsel %vm1316, %v1281, 0
      %v1339 = vsel %vm1316, %v1283, 0
      %v1341 = vsel %vm1316, %v1285, 0
      %v1343 = vsel %vm1316, %v1287, 0
      %v1345 = vsel %vm1316, %v1289, 0
      %v1347 = vsel %vm1316, %v1291, 0
      %vm1349 = vcmask 1041408
      %v1351 = vsel %vm1349, %v1313, 0
      %1353 = vmatpush.bf16.msra.mxu0 0
      %1354 = vmatpush.bf16.msra.mxu0 0
      %1355 = vmatpush.bf16.msra.mxu0 0
      %1356 = vmatpush.bf16.msra.mxu0 0
      %1357 = vmatpush.bf16.msra.mxu0 0
      %1358 = vmatpush.bf16.msra.mxu0 %v1351
      %1359 = vmatpush.bf16.msra.mxu0 %v1312
      %1360 = vmatpush.bf16.msra.mxu0 %v1311
      %1361 = vmatmul.bf16.gmra.mxu0 %v1317
      %v1362 = vpop.f32.mrf.mxu0
      %v1363 = vadd.f32 %v1299, %v1362
      %v1364 = vpop.f32.mrf.mxu0
      %v1365 = vadd.f32 %v1299, %v1364
      %1366 = vmatmul.bf16.gmra.mxu0 %v1319
      %v1367 = vpop.f32.mrf.mxu0
      %v1368 = vadd.f32 %v1299, %v1367
      %v1369 = vpop.f32.mrf.mxu0
      %v1370 = vadd.f32 %v1299, %v1369
      %1371 = vmatmul.bf16.gmra.mxu0 %v1321
      %v1372 = vpop.f32.mrf.mxu0
      %v1373 = vadd.f32 %v1299, %v1372
      %v1374 = vpop.f32.mrf.mxu0
      %v1375 = vadd.f32 %v1299, %v1374
      %1376 = vmatmul.bf16.gmra.mxu0 %v1323
      %v1377 = vpop.f32.mrf.mxu0
      %v1378 = vadd.f32 %v1299, %v1377
      %v1379 = vpop.f32.mrf.mxu0
      %v1380 = vadd.f32 %v1299, %v1379
      %1381 = vmatmul.bf16.gmra.mxu0 %v1325
      %v1382 = vpop.f32.mrf.mxu0
      %v1383 = vadd.f32 %v1299, %v1382
      %v1384 = vpop.f32.mrf.mxu0
      %v1385 = vadd.f32 %v1299, %v1384
      %1386 = vmatmul.bf16.gmra.mxu0 %v1327
      %v1387 = vpop.f32.mrf.mxu0
      %v1388 = vadd.f32 %v1299, %v1387
      %v1389 = vpop.f32.mrf.mxu0
      %v1390 = vadd.f32 %v1299, %v1389
      %1391 = vmatmul.bf16.gmra.mxu0 %v1329
      %v1392 = vpop.f32.mrf.mxu0
      %v1393 = vadd.f32 %v1299, %v1392
      %v1394 = vpop.f32.mrf.mxu0
      %v1395 = vadd.f32 %v1299, %v1394
      %1396 = vmatmul.bf16.gmra.mxu0 %v1331
      %v1397 = vpop.f32.mrf.mxu0
      %v1398 = vadd.f32 %v1299, %v1397
      %v1399 = vpop.f32.mrf.mxu0
      %v1400 = vadd.f32 %v1299, %v1399
      %1401 = vmatmul.bf16.gmra.mxu0 %v1333
      %v1402 = vpop.f32.mrf.mxu0
      %v1403 = vadd.f32 %v1299, %v1402
      %v1404 = vpop.f32.mrf.mxu0
      %v1405 = vadd.f32 %v1299, %v1404
      %1406 = vmatmul.bf16.gmra.mxu0 %v1335
      %v1407 = vpop.f32.mrf.mxu0
      %v1408 = vadd.f32 %v1299, %v1407
      %v1409 = vpop.f32.mrf.mxu0
      %v1410 = vadd.f32 %v1299, %v1409
      %1411 = vmatmul.bf16.gmra.mxu0 %v1337
      %v1412 = vpop.f32.mrf.mxu0
      %v1413 = vadd.f32 %v1299, %v1412
      %v1414 = vpop.f32.mrf.mxu0
      %v1415 = vadd.f32 %v1299, %v1414
      %1416 = vmatmul.bf16.gmra.mxu0 %v1339
      %v1417 = vpop.f32.mrf.mxu0
      %v1418 = vadd.f32 %v1299, %v1417
      %v1419 = vpop.f32.mrf.mxu0
      %v1420 = vadd.f32 %v1299, %v1419
      %1421 = vmatmul.bf16.gmra.mxu0 %v1341
      %v1422 = vpop.f32.mrf.mxu0
      %v1423 = vadd.f32 %v1299, %v1422
      %v1424 = vpop.f32.mrf.mxu0
      %v1425 = vadd.f32 %v1299, %v1424
      %1426 = vmatmul.bf16.gmra.mxu0 %v1343
      %v1427 = vpop.f32.mrf.mxu0
      %v1428 = vadd.f32 %v1299, %v1427
      %v1429 = vpop.f32.mrf.mxu0
      %v1430 = vadd.f32 %v1299, %v1429
      %1431 = vmatmul.bf16.gmra.mxu0 %v1345
      %v1432 = vpop.f32.mrf.mxu0
      %v1433 = vadd.f32 %v1299, %v1432
      %v1434 = vpop.f32.mrf.mxu0
      %v1435 = vadd.f32 %v1299, %v1434
      %1436 = vmatmul.bf16.gmra.mxu0 %v1347
      %v1437 = vpop.f32.mrf.mxu0
      %v1438 = vadd.f32 %v1299, %v1437
      %v1439 = vpop.f32.mrf.mxu0
      %v1440 = vadd.f32 %v1299, %v1439
      %1441 = vdwg.mxu0
      %s1442 = sld [smem:[#allocation2]]
      %vm1443 = vcmp.gt.f32.partialorder %v1363, 0.0
      %vm1444 = vcmp.gt.f32.partialorder %v1365, 0.0
      %vm1445 = vcmp.gt.f32.partialorder %v1368, 0.0
      %vm1446 = vcmp.gt.f32.partialorder %v1370, 0.0
      %vm1447 = vcmp.gt.f32.partialorder %v1373, 0.0
      %vm1448 = vcmp.gt.f32.partialorder %v1375, 0.0
      %vm1449 = vcmp.gt.f32.partialorder %v1378, 0.0
      %vm1450 = vcmp.gt.f32.partialorder %v1380, 0.0
      %vm1451 = vcmp.gt.f32.partialorder %v1383, 0.0
      %vm1452 = vcmp.gt.f32.partialorder %v1385, 0.0
      %vm1453 = vcmp.gt.f32.partialorder %v1388, 0.0
      %vm1454 = vcmp.gt.f32.partialorder %v1390, 0.0
      %vm1455 = vcmp.gt.f32.partialorder %v1393, 0.0
      %vm1456 = vcmp.gt.f32.partialorder %v1395, 0.0
      %vm1457 = vcmp.gt.f32.partialorder %v1398, 0.0
      %vm1458 = vcmp.gt.f32.partialorder %v1400, 0.0
      %vm1459 = vcmp.gt.f32.partialorder %v1403, 0.0
      %vm1460 = vcmp.gt.f32.partialorder %v1405, 0.0
      %vm1461 = vcmp.gt.f32.partialorder %v1408, 0.0
      %vm1462 = vcmp.gt.f32.partialorder %v1410, 0.0
      %vm1463 = vcmp.gt.f32.partialorder %v1413, 0.0
      %vm1464 = vcmp.gt.f32.partialorder %v1415, 0.0
      %vm1465 = vcmp.gt.f32.partialorder %v1418, 0.0
      %vm1466 = vcmp.gt.f32.partialorder %v1420, 0.0
      %vm1467 = vcmp.gt.f32.partialorder %v1423, 0.0
      %vm1468 = vcmp.gt.f32.partialorder %v1425, 0.0
      %vm1469 = vcmp.gt.f32.partialorder %v1428, 0.0
      %vm1470 = vcmp.gt.f32.partialorder %v1430, 0.0
      %vm1471 = vcmp.gt.f32.partialorder %v1433, 0.0
      %vm1472 = vcmp.gt.f32.partialorder %v1435, 0.0
      %vm1473 = vcmp.gt.f32.partialorder %v1438, 0.0
      %vm1474 = vcmp.gt.f32.partialorder %v1440, 0.0
      %v1475 = vstv %s1442
      %v1476 = vmul.f32 %v1475, %v1363
      %v1477 = vmul.f32 %v1475, %v1365
      %v1478 = vmul.f32 %v1475, %v1368
      %v1479 = vmul.f32 %v1475, %v1370
      %v1480 = vmul.f32 %v1475, %v1373
      %v1481 = vmul.f32 %v1475, %v1375
      %v1482 = vmul.f32 %v1475, %v1378
      %v1483 = vmul.f32 %v1475, %v1380
      %v1484 = vmul.f32 %v1475, %v1383
      %v1485 = vmul.f32 %v1475, %v1385
      %v1486 = vmul.f32 %v1475, %v1388
      %v1487 = vmul.f32 %v1475, %v1390
      %v1488 = vmul.f32 %v1475, %v1393
      %v1489 = vmul.f32 %v1475, %v1395
      %v1490 = vmul.f32 %v1475, %v1398
      %v1491 = vmul.f32 %v1475, %v1400
      %v1492 = vmul.f32 %v1475, %v1403
      %v1493 = vmul.f32 %v1475, %v1405
      %v1494 = vmul.f32 %v1475, %v1408
      %v1495 = vmul.f32 %v1475, %v1410
      %v1496 = vmul.f32 %v1475, %v1413
      %v1497 = vmul.f32 %v1475, %v1415
      %v1498 = vmul.f32 %v1475, %v1418
      %v1499 = vmul.f32 %v1475, %v1420
      %v1500 = vmul.f32 %v1475, %v1423
      %v1501 = vmul.f32 %v1475, %v1425
      %v1502 = vmul.f32 %v1475, %v1428
      %v1503 = vmul.f32 %v1475, %v1430
      %v1504 = vmul.f32 %v1475, %v1433
      %v1505 = vmul.f32 %v1475, %v1435
      %v1506 = vmul.f32 %v1475, %v1438
      %v1507 = vmul.f32 %v1475, %v1440
      %v1508 = vsel %vm1443, %v1363, %v1476
      %v1509 = vsel %vm1444, %v1365, %v1477
      %v1510 = vsel %vm1445, %v1368, %v1478
      %v1511 = vsel %vm1446, %v1370, %v1479
      %v1512 = vsel %vm1447, %v1373, %v1480
      %v1513 = vsel %vm1448, %v1375, %v1481
      %v1514 = vsel %vm1449, %v1378, %v1482
      %v1515 = vsel %vm1450, %v1380, %v1483
      %v1516 = vsel %vm1451, %v1383, %v1484
      %v1517 = vsel %vm1452, %v1385, %v1485
      %v1518 = vsel %vm1453, %v1388, %v1486
      %v1519 = vsel %vm1454, %v1390, %v1487
      %v1520 = vsel %vm1455, %v1393, %v1488
      %v1521 = vsel %vm1456, %v1395, %v1489
      %v1522 = vsel %vm1457, %v1398, %v1490
      %v1523 = vsel %vm1458, %v1400, %v1491
      %v1524 = vsel %vm1459, %v1403, %v1492
      %v1525 = vsel %vm1460, %v1405, %v1493
      %v1526 = vsel %vm1461, %v1408, %v1494
      %v1527 = vsel %vm1462, %v1410, %v1495
      %v1528 = vsel %vm1463, %v1413, %v1496
      %v1529 = vsel %vm1464, %v1415, %v1497
      %v1530 = vsel %vm1465, %v1418, %v1498
      %v1531 = vsel %vm1466, %v1420, %v1499
      %v1532 = vsel %vm1467, %v1423, %v1500
      %v1533 = vsel %vm1468, %v1425, %v1501
      %v1534 = vsel %vm1469, %v1428, %v1502
      %v1535 = vsel %vm1470, %v1430, %v1503
      %v1536 = vsel %vm1471, %v1433, %v1504
      %v1537 = vsel %vm1472, %v1435, %v1505
      %v1538 = vsel %vm1473, %v1438, %v1506
      %v1539 = vsel %vm1474, %v1440, %v1507
      %v1540 = vpack.c.bf16 %v1508, %v1508
      %v1541 = vpack.c.bf16 %v1509, %v1509
      %v1542 = vpack.c.bf16 %v1510, %v1510
      %v1543 = vpack.c.bf16 %v1511, %v1511
      %v1544 = vpack.c.bf16 %v1512, %v1512
      %v1545 = vpack.c.bf16 %v1513, %v1513
      %v1546 = vpack.c.bf16 %v1514, %v1514
      %v1547 = vpack.c.bf16 %v1515, %v1515
      %v1548 = vpack.c.bf16 %v1516, %v1516
      %v1549 = vpack.c.bf16 %v1517, %v1517
      %v1550 = vpack.c.bf16 %v1518, %v1518
      %v1551 = vpack.c.bf16 %v1519, %v1519
      %v1552 = vpack.c.bf16 %v1520, %v1520
      %v1553 = vpack.c.bf16 %v1521, %v1521
      %v1554 = vpack.c.bf16 %v1522, %v1522
      %v1555 = vpack.c.bf16 %v1523, %v1523
      %v1556 = vpack.c.bf16 %v1524, %v1524
      %v1557 = vpack.c.bf16 %v1525, %v1525
      %v1558 = vpack.c.bf16 %v1526, %v1526
      %v1559 = vpack.c.bf16 %v1527, %v1527
      %v1560 = vpack.c.bf16 %v1528, %v1528
      %v1561 = vpack.c.bf16 %v1529, %v1529
      %v1562 = vpack.c.bf16 %v1530, %v1530
      %v1563 = vpack.c.bf16 %v1531, %v1531
      %v1564 = vpack.c.bf16 %v1532, %v1532
      %v1565 = vpack.c.bf16 %v1533, %v1533
      %v1566 = vpack.c.bf16 %v1534, %v1534
      %v1567 = vpack.c.bf16 %v1535, %v1535
      %v1568 = vpack.c.bf16 %v1536, %v1536
      %v1569 = vpack.c.bf16 %v1537, %v1537
      %v1570 = vpack.c.bf16 %v1538, %v1538
      %v1571 = vpack.c.bf16 %v1539, %v1539
      %vm1572 = vcmask 125952
      %1573 = vst.msk [vmem:[%s300] sm:$0xf] %vm1572, %v1540
      %1574 = vst.msk [vmem:[%s300 + $0x4] sm:$0xf] %vm1572, %v1541
      %1575 = vst.msk [vmem:[%s300 + $0x8] sm:$0xf] %vm1572, %v1542
      %1576 = vst.msk [vmem:[%s300 + $0xc] sm:$0xf] %vm1572, %v1543
      %1577 = vst.msk [vmem:[%s300 + $0x10] sm:$0xf] %vm1572, %v1544
      %1578 = vst.msk [vmem:[%s300 + $0x14] sm:$0xf] %vm1572, %v1545
      %1579 = vst.msk [vmem:[%s300 + $0x18] sm:$0xf] %vm1572, %v1546
      %1580 = vst.msk [vmem:[%s300 + $0x1c] sm:$0xf] %vm1572, %v1547
      %1581 = vst.msk [vmem:[%s300 + $0x20] sm:$0xf] %vm1572, %v1548
      %1582 = vst.msk [vmem:[%s300 + $0x24] sm:$0xf] %vm1572, %v1549
      %1583 = vst.msk [vmem:[%s300 + $0x28] sm:$0xf] %vm1572, %v1550
      %1584 = vst.msk [vmem:[%s300 + $0x2c] sm:$0xf] %vm1572, %v1551
      %1585 = vst.msk [vmem:[%s300 + $0x30] sm:$0xf] %vm1572, %v1552
      %1586 = vst.msk [vmem:[%s300 + $0x34] sm:$0xf] %vm1572, %v1553
      %1587 = vst.msk [vmem:[%s300 + $0x38] sm:$0xf] %vm1572, %v1554
      %1588 = vst.msk [vmem:[%s300 + $0x3c] sm:$0xf] %vm1572, %v1555
      %1589 = vst.msk [vmem:[%s300 + $0x40] sm:$0xf] %vm1572, %v1556
      %1590 = vst.msk [vmem:[%s300 + $0x44] sm:$0xf] %vm1572, %v1557
      %1591 = vst.msk [vmem:[%s300 + $0x48] sm:$0xf] %vm1572, %v1558
      %1592 = vst.msk [vmem:[%s300 + $0x4c] sm:$0xf] %vm1572, %v1559
      %1593 = vst.msk [vmem:[%s300 + $0x50] sm:$0xf] %vm1572, %v1560
      %1594 = vst.msk [vmem:[%s300 + $0x54] sm:$0xf] %vm1572, %v1561
      %1595 = vst.msk [vmem:[%s300 + $0x58] sm:$0xf] %vm1572, %v1562
      %1596 = vst.msk [vmem:[%s300 + $0x5c] sm:$0xf] %vm1572, %v1563
      %1597 = vst.msk [vmem:[%s300 + $0x60] sm:$0xf] %vm1572, %v1564
      %1598 = vst.msk [vmem:[%s300 + $0x64] sm:$0xf] %vm1572, %v1565
      %1599 = vst.msk [vmem:[%s300 + $0x68] sm:$0xf] %vm1572, %v1566
      %1600 = vst.msk [vmem:[%s300 + $0x6c] sm:$0xf] %vm1572, %v1567
      %1601 = vst.msk [vmem:[%s300 + $0x70] sm:$0xf] %vm1572, %v1568
      %1602 = vst.msk [vmem:[%s300 + $0x74] sm:$0xf] %vm1572, %v1569
      %1603 = vst.msk [vmem:[%s300 + $0x78] sm:$0xf] %vm1572, %v1570
      %1604 = vst.msk [vmem:[%s300 + $0x7c] sm:$0xf] %vm1572, %v1571
      %p1605 = scmp.lt.s32.totalorder %s21, 1
      %s1606 = scalar_select %p1605, %s21, 1
      %p1607 = scmp.lt.s32.totalorder %s22, 0
      %s1608 = scalar_select %p1607, %s22, 0
      %s1609 = smul.addr %s1608, 32
      %s1610 = smul.addr %s1606, 32
      %s1611 = sadd.s32 %s1609, %s1610
      %s1612 = smul.addr %s1611, 4
      %s1613 = scalar_lea.vmem %s5, %s1612
      // Predicated region
      $region41: #{upsample_block.1} parent=39 // pred_check
        %p1614 = pneg %p168
      $region42: #{upsample_block.1} parent=39 // pred_check_branch
        %1616 = sbr.rel (%p1614) target = $region44
      $region43: #{upsample_block.1} parent=39 // pred_region
        _
      $region44: #{upsample_block.1} parent=39 // pred_fallthru
        _
    $region40: #{upsample_block.1} parent=5 // pred_fallthru
      _
    %p1617 = scmp.le.s32.totalorder 2, %s12
    // Predicated region
    $region45: #{upsample_block.1} parent=5 // pred_check
      %p1618 = pneg %p1617
    $region46: #{upsample_block.1} parent=5 // pred_check_branch
      %1620 = sbr.rel (%p1618) target = $region48
    $region47: #{upsample_block.1} parent=5 // pred_region
      %s1621 = ssub.s32 %s12, 2
      // Predicated region
      $region49: #{upsample_block.1} parent=47 // pred_check
        %p1622 = pneg %p174
      $region50: #{upsample_block.1} parent=47 // pred_check_branch
        %1624 = sbr.rel (%p1622) target = $region52
      $region51: #{upsample_block.1} parent=47 // pred_region
        %p1625 = scmp.lt.s32.totalorder %s23, 1
        %s1626 = scalar_select %p1625, %s23, 1
        %p1627 = scmp.lt.s32.totalorder %s24, 0
        %s1628 = scalar_select %p1627, %s24, 0
        %s1629 = smul.addr %s1628, 32
        %s1630 = smul.addr %s1626, 32
        %s1631 = sadd.s32 %s1629, %s1630
        %s1632 = smul.addr %s1631, 4
        %s1633 = scalar_lea.vmem %s5, %s1632
      $region52: #{upsample_block.1} parent=47 // pred_fallthru
        _
    $region48: #{upsample_block.1} parent=5 // pred_fallthru
      _
  $region6: #{upsample_block.1} parent=0 // loop_footer
    %s16 = sadd.s32 1, %s12
  $region7: #{upsample_block.1} parent=0 // loop_footer_branch
    %11 = sbr.rel target = $region3
  $region8: #{upsample_block.1} parent=0 // loop_exit
    _

</llo_original>
